<compile_context>
chip_gen: v5e
topology: v5e:2x2
jax: 0.10.0
libtpu: 0.0.40
codegen_flags: <defaults>
</compile_context>

<pallas_src>
import functools
import math

import numpy as np
import jax
import jax.numpy as jnp
from jax import lax
from jax.experimental import pallas as pl
from jax.experimental.pallas import tpu as pltpu


# --------------------------------------------------------------------------
# Module parameters
# --------------------------------------------------------------------------
def _eca_k_size(channels, gamma=2, b=1):
    # mirrors EcaLayer.__init__
    t = int(abs((math.log2(channels) + b) / gamma))
    return t if t % 2 else t + 1


# --------------------------------------------------------------------------
# Shared in-kernel math
# --------------------------------------------------------------------------
def _channel_gate(sums, w_ref, channels, inv_hw):
    """sums: (R, 1) f32 per-(batch, channel) spatial sums; rows are whole
    batches of `channels` consecutive channels.  Returns sigmoid(conv1d(mean))
    as an (R, 1) f32 column (zero-padded conv at each batch's channel edges)."""
    rows = sums.shape[0]
    k = w_ref.shape[0]
    pad = (k - 1) // 2

    y = sums * inv_hw                                            # (R, 1) means
    ch = lax.broadcasted_iota(jnp.int32, (rows, 1), 0) % channels

    conv = w_ref[pad] * y
    for t in range(k):
        d = t - pad
        if d == 0:
            continue
        # tap[r] = y[r + d]; rows whose neighbor falls outside this row's own
        # channel block (incl. roll wrap-around) are masked to zero padding.
        tap = pltpu.roll(y, shift=(-d) % rows, axis=0)
        chd = ch + d
        tap = jnp.where((chd >= 0) & (chd < channels), tap, 0.0)
        conv = conv + w_ref[t] * tap
    return jax.nn.sigmoid(conv)                                  # (R, 1) f32


# --------------------------------------------------------------------------
# Kernels
# --------------------------------------------------------------------------
def _eca_fused_kernel(w_ref, x_ref, o_ref, *, channels, inv_hw):
    """Single pass: pool over HW, k-tap channel conv, sigmoid gate, multiply."""
    x = x_ref[...]                                               # (R, HW), input dtype
    sums = jnp.sum(x, axis=1, keepdims=True, dtype=jnp.float32)  # lane reduce
    gate = _channel_gate(sums, w_ref, channels, inv_hw)          # (R, 1) f32
    o_ref[...] = x * gate.astype(x.dtype)


def _eca_pool_gate_kernel(w_ref, x_ref, gate_ref, *, channels, inv_hw,
                          hw_total, hw_tile, ragged):
    """Two-pass fallback, pass 1: accumulate spatial sums over HW tiles, then
    turn the resident accumulator into the sigmoid gate on the last tile."""
    j = pl.program_id(1)

    @pl.when(j == 0)
    def _init():
        gate_ref[...] = jnp.zeros_like(gate_ref)

    x = x_ref[...]                                               # (R, hw_tile)
    if ragged:
        lane = lax.broadcasted_iota(jnp.int32, x.shape, 1)
        x = jnp.where(j * hw_tile + lane < hw_total, x, jnp.zeros_like(x))
    gate_ref[...] += jnp.sum(x, axis=1, keepdims=True, dtype=jnp.float32)

    @pl.when(j == pl.num_programs(1) - 1)
    def _finalize():
        gate_ref[...] = _channel_gate(gate_ref[...], w_ref, channels, inv_hw)


def _eca_apply_kernel(gate_ref, x_ref, o_ref):
    """Two-pass fallback, pass 2: o = x * gate (per-row scalar broadcast)."""
    o_ref[...] = x_ref[...] * gate_ref[...].astype(o_ref.dtype)


# --------------------------------------------------------------------------
# Block / VMEM sizing helpers
# --------------------------------------------------------------------------
def _vmem_budget_bytes():
    cap = 64 << 20          # conservative default (v7x physical VMEM) if query fails
    try:
        info = pltpu.get_tpu_info()
        cap = int(getattr(info, "vmem_capacity_bytes", cap))
    except Exception:
        pass
    # Leave headroom for compiler-internal scratch / semaphores / metadata:
    # ~52 MiB usable on v7x, ~116 MiB on v5e/v6e.
    return max(cap - (12 << 20), 16 << 20)


def _vmem_limit_bytes(need, budget):
    # estimated live buffers + >= 4 MiB slack, never above the per-chip budget
    return int(min(max(need + (4 << 20), 16 << 20), budget))


def _pick_batches_per_block(B, C, HW, itemsize, budget):
    """Batches per fused block, or None if one batch's (C, HW) slab won't fit."""
    per_batch = C * HW * itemsize
    fits = lambda n: 4 * n * per_batch + (4 << 20) <= budget     # in+out, 2x buffered
    if C % 8:                       # rows must be /8 or the full dim (rare for ECA)
        return B if fits(B) else None
    if not fits(1):
        return None
    nb = min(B, max(1, (4 << 20) // per_batch))                  # target ~4 MiB blocks
    while nb > 1 and not fits(nb):
        nb -= 1
    if B >= 2:
        nb = max(1, min(nb, B // 2))   # keep >= 2 grid steps (megacore / pipelining)
    while B % nb:                      # blocks must tile the batch exactly
        nb -= 1
    return nb


def _pick_hw_tile(C, HW, itemsize, budget):
    """HW tile (multiple of 128) for the two-pass path."""
    per_col = C * itemsize
    cap = min((budget - (4 << 20)) // (4 * per_col),             # pass-2 in+out, 2x buffered
              (8 << 20) // per_col)                              # ~8 MiB block target
    cap = max(128, int(cap) // 128 * 128)
    if cap >= HW:
        return HW
    t = cap
    while t >= 128:                                              # prefer an exact divisor
        if HW % t == 0:
            return t
        t -= 128
    return cap                                                   # ragged tail is masked


# --------------------------------------------------------------------------
# Wrapper
# --------------------------------------------------------------------------
def eca_forward(x, w, *, two_pass=None, hw_tile=None):
    """x: (B, C, H, W) NCHW, w: (k,) conv1d taps.  Returns (B, C, H, W)."""
    B, C, H, W = x.shape
    HW = H * W
    itemsize = x.dtype.itemsize
    x2 = x.reshape(B * C, HW)          # free reshape: contiguous NCHW -> (B*C, HW)
    budget = _vmem_budget_bytes()

    nb = _pick_batches_per_block(B, C, HW, itemsize, budget)
    use_two_pass = (nb is None) if two_pass is None else bool(two_pass)

    if not use_two_pass:
        # ---------------- single fused pass (min HBM traffic: 1R + 1W) -----
        R = nb * C
        block_bytes = R * HW * itemsize
        out2 = pl.pallas_call(
            functools.partial(_eca_fused_kernel, channels=C, inv_hw=1.0 / HW),
            out_shape=jax.ShapeDtypeStruct((B * C, HW), x.dtype),
            grid_spec=pl.GridSpec(
                grid=(B // nb,),
                in_specs=[
                    pl.BlockSpec(memory_space=pltpu.MemorySpace.SMEM),   # (k,) taps
                    pl.BlockSpec((R, HW), lambda i: (i, 0)),             # x rows
                ],
                out_specs=pl.BlockSpec((R, HW), lambda i: (i, 0)),
            ),
            compiler_params=pltpu.CompilerParams(
                dimension_semantics=("parallel",),
                vmem_limit_bytes=_vmem_limit_bytes(4 * block_bytes, budget),
            ),
        )(w, x2)
        return out2.reshape(B, C, H, W)

    # ---------------- two-pass fallback (pool+gate, then apply) ------------
    thw = hw_tile if hw_tile is not None else _pick_hw_tile(C, HW, itemsize, budget)
    R = C if C % 8 == 0 else B * C
    n_rows = (B * C) // R
    n_hw = pl.cdiv(HW, thw)
    ragged = (HW % thw) != 0

    gate = pl.pallas_call(
        functools.partial(_eca_pool_gate_kernel, channels=C, inv_hw=1.0 / HW,
                          hw_total=HW, hw_tile=thw, ragged=ragged),
        out_shape=jax.ShapeDtypeStruct((B * C, 1), jnp.float32),
        grid_spec=pl.GridSpec(
            grid=(n_rows, n_hw),
            in_specs=[
                pl.BlockSpec(memory_space=pltpu.MemorySpace.SMEM),       # (k,) taps
                pl.BlockSpec((R, thw), lambda i, j: (i, j)),             # x tile
            ],
            out_specs=pl.BlockSpec((R, 1), lambda i, j: (i, 0)),         # resident acc
        ),
        compiler_params=pltpu.CompilerParams(
            dimension_semantics=("parallel", "arbitrary"),
            vmem_limit_bytes=_vmem_limit_bytes(2 * R * thw * itemsize, budget),
        ),
    )(w, x2)

    out2 = pl.pallas_call(
        _eca_apply_kernel,
        out_shape=jax.ShapeDtypeStruct((B * C, HW), x.dtype),
        grid_spec=pl.GridSpec(
            grid=(n_rows, n_hw),
            in_specs=[
                pl.BlockSpec((R, 1), lambda i, j: (i, 0)),               # gate column
                pl.BlockSpec((R, thw), lambda i, j: (i, j)),             # x tile
            ],
            out_specs=pl.BlockSpec((R, thw), lambda i, j: (i, j)),
        ),
        compiler_params=pltpu.CompilerParams(
            dimension_semantics=("parallel", "parallel"),
            vmem_limit_bytes=_vmem_limit_bytes(4 * R * thw * itemsize, budget),
        ),
    )(gate, x2)
    return out2.reshape(B, C, H, W)


# --------------------------------------------------------------------------
# Reference (matches the PyTorch forward)
# --------------------------------------------------------------------------
def eca_reference(x, w):
    y = np.mean(x, axis=(2, 3))                      # (B, C) == AdaptiveAvgPool2d(1)
    B, C = y.shape
    k = w.shape[0]
    pad = (k - 1) // 2
    yp = np.pad(y, ((0, 0), (pad, pad)))
    conv = np.zeros_like(y)
    for t in range(k):
        conv += w[t] * yp[:, t:t + C]
    gate = 1.0 / (1.0 + np.exp(-conv))
    return x * gate[:, :, None, None]


if __name__ == "__main__":
    key = jax.random.PRNGKey(0)
    kx, kw = jax.random.split(key)

    B, C = 2, 128                                    # channels=128 -> k_size=5
    k_size = _eca_k_size(C)
    # nn.Conv1d(1, 1, k_size, bias=False).weight, flattened to (k,); synthetic
    # deterministic init ~ U(-1/sqrt(k), 1/sqrt(k)).
    w = (jax.random.uniform(kw, (k_size,), jnp.float32) - 0.5) * (2.0 / math.sqrt(k_size))

    # 1) fused single-pass path (native NCHW layout, no transposes)
    x1 = jax.random.normal(kx, (B, C, 8, 8), jnp.float32)
    o1 = eca_forward(x1, w)
    jax.block_until_ready(o1)
    np.testing.assert_allclose(np.asarray(o1),
                               eca_reference(np.asarray(x1), np.asarray(w)),
                               rtol=1e-5, atol=1e-5)

    # 2) two-pass fallback (forced), even HW split: exercises the pooled-sum accumulator
    x2 = jax.random.normal(kx, (B, C, 16, 16), jnp.float32)
    o2 = eca_forward(x2, w, two_pass=True, hw_tile=128)
    jax.block_until_ready(o2)
    np.testing.assert_allclose(np.asarray(o2),
                               eca_reference(np.asarray(x2), np.asarray(w)),
                               rtol=1e-5, atol=1e-5)

    # 3) two-pass fallback (forced), ragged HW tail: exercises the masked partial tile
    x3 = jax.random.normal(kx, (B, C, 12, 12), jnp.float32)
    o3 = eca_forward(x3, w, two_pass=True, hw_tile=128)
    jax.block_until_ready(o3)
    np.testing.assert_allclose(np.asarray(o3),
                               eca_reference(np.asarray(x3), np.asarray(w)),
                               rtol=1e-5, atol=1e-5)

    print("KERNEL_OK")
</pallas_src>

<mosaic_0001>
module attributes {stable_mosaic.version = 11 : i64} {
  func.func @_eca_fused_kernel(%arg0: i32, %arg1: memref<5xf32, #tpu.memory_space<smem>>, %arg2: memref<128x64xf32, #tpu.memory_space<vmem>>, %arg3: memref<128x64xf32, #tpu.memory_space<vmem>>) attributes {dimension_semantics = [#tpu.dimension_semantics<parallel>], iteration_bounds = array<i64: 2>, scalar_prefetch = 0 : i64, scratch_operands = 0 : i64, tpu.core_type = #tpu.core_type<tc>, window_params = [{transform_indices = @transform_0, window_bounds = array<i64: 5>}, {transform_indices = @transform_1, window_bounds = array<i64: 128, 64>}, {transform_indices = @transform_2, window_bounds = array<i64: 128, 64>}]} {
    %c0 = arith.constant 0 : index
    %c0_0 = arith.constant 0 : index
    %0 = vector.load %arg2[%c0, %c0_0] : memref<128x64xf32, #tpu.memory_space<vmem>>, vector<128x64xf32>
    %cst = arith.constant dense<0.000000e+00> : vector<128xf32>
    %1 = vector.multi_reduction <add>, %0, %cst [1] : vector<128x64xf32> to vector<128xf32>
    %2 = vector.shape_cast %1 : vector<128xf32> to vector<128x1xf32>
    %cst_1 = arith.constant 1.562500e-02 : f32
    %3 = vector.broadcast %cst_1 : f32 to vector<128x1xf32>
    %4 = arith.mulf %2, %3 : vector<128x1xf32>
    %5 = tpu.iota {dimensions = array<i32: 0>} : vector<128x1xi32>
    %c128_i32 = arith.constant 128 : i32
    %c0_i32 = arith.constant 0 : i32
    %6 = arith.cmpi eq, %c128_i32, %c0_i32 : i32
    %c1_i32 = arith.constant 1 : i32
    %7 = arith.select %6, %c1_i32, %c128_i32 : i32
    %8 = vector.broadcast %7 : i32 to vector<128x1xi32>
    %9 = arith.remsi %5, %8 : vector<128x1xi32>
    %c0_i32_2 = arith.constant 0 : i32
    %10 = vector.broadcast %c0_i32_2 : i32 to vector<128x1xi32>
    %11 = arith.cmpi ne, %9, %10 : vector<128x1xi32>
    %c0_i32_3 = arith.constant 0 : i32
    %12 = vector.broadcast %c0_i32_3 : i32 to vector<128x1xi32>
    %13 = arith.cmpi slt, %9, %12 : vector<128x1xi32>
    %c0_i32_4 = arith.constant 0 : i32
    %14 = arith.cmpi slt, %7, %c0_i32_4 : i32
    %15 = vector.broadcast %14 : i1 to vector<128x1xi1>
    %16 = vector.broadcast %15 : vector<128x1xi1> to vector<128x1xi1>
    %17 = arith.xori %13, %16 : vector<128x1xi1>
    %18 = arith.andi %17, %11 : vector<128x1xi1>
    %19 = vector.broadcast %7 : i32 to vector<128x1xi32>
    %20 = arith.addi %9, %19 : vector<128x1xi32>
    %21 = arith.select %18, %20, %9 : vector<128x1xi1>, vector<128x1xi32>
    %c2 = arith.constant 2 : index
    %22 = memref.load %arg1[%c2] : memref<5xf32, #tpu.memory_space<smem>>
    %23 = vector.broadcast %22 : f32 to vector<128x1xf32>
    %24 = arith.mulf %23, %4 : vector<128x1xf32>
    %c2_i32 = arith.constant 2 : i32
    %25 = tpu.dynamic_rotate %4 by %c2_i32 dim 0 : vector<128x1xf32>, i32 -> vector<128x1xf32>
    %c-2_i32 = arith.constant -2 : i32
    %26 = vector.broadcast %c-2_i32 : i32 to vector<128x1xi32>
    %27 = arith.addi %21, %26 : vector<128x1xi32>
    %c0_i32_5 = arith.constant 0 : i32
    %28 = vector.broadcast %c0_i32_5 : i32 to vector<128x1xi32>
    %29 = arith.cmpi sge, %27, %28 : vector<128x1xi32>
    %c128_i32_6 = arith.constant 128 : i32
    %30 = vector.broadcast %c128_i32_6 : i32 to vector<128x1xi32>
    %31 = arith.cmpi slt, %27, %30 : vector<128x1xi32>
    %32 = arith.andi %29, %31 : vector<128x1xi1>
    %cst_7 = arith.constant 0.000000e+00 : f32
    %33 = vector.broadcast %cst_7 : f32 to vector<128x1xf32>
    %34 = arith.select %32, %25, %33 : vector<128x1xi1>, vector<128x1xf32>
    %c0_8 = arith.constant 0 : index
    %35 = memref.load %arg1[%c0_8] : memref<5xf32, #tpu.memory_space<smem>>
    %36 = vector.broadcast %35 : f32 to vector<128x1xf32>
    %37 = arith.mulf %36, %34 : vector<128x1xf32>
    %38 = arith.addf %24, %37 : vector<128x1xf32>
    %c1_i32_9 = arith.constant 1 : i32
    %39 = tpu.dynamic_rotate %4 by %c1_i32_9 dim 0 : vector<128x1xf32>, i32 -> vector<128x1xf32>
    %c-1_i32 = arith.constant -1 : i32
    %40 = vector.broadcast %c-1_i32 : i32 to vector<128x1xi32>
    %41 = arith.addi %21, %40 : vector<128x1xi32>
    %c0_i32_10 = arith.constant 0 : i32
    %42 = vector.broadcast %c0_i32_10 : i32 to vector<128x1xi32>
    %43 = arith.cmpi sge, %41, %42 : vector<128x1xi32>
    %c128_i32_11 = arith.constant 128 : i32
    %44 = vector.broadcast %c128_i32_11 : i32 to vector<128x1xi32>
    %45 = arith.cmpi slt, %41, %44 : vector<128x1xi32>
    %46 = arith.andi %43, %45 : vector<128x1xi1>
    %cst_12 = arith.constant 0.000000e+00 : f32
    %47 = vector.broadcast %cst_12 : f32 to vector<128x1xf32>
    %48 = arith.select %46, %39, %47 : vector<128x1xi1>, vector<128x1xf32>
    %c1 = arith.constant 1 : index
    %49 = memref.load %arg1[%c1] : memref<5xf32, #tpu.memory_space<smem>>
    %50 = vector.broadcast %49 : f32 to vector<128x1xf32>
    %51 = arith.mulf %50, %48 : vector<128x1xf32>
    %52 = arith.addf %38, %51 : vector<128x1xf32>
    %c127_i32 = arith.constant 127 : i32
    %53 = tpu.dynamic_rotate %4 by %c127_i32 dim 0 : vector<128x1xf32>, i32 -> vector<128x1xf32>
    %c1_i32_13 = arith.constant 1 : i32
    %54 = vector.broadcast %c1_i32_13 : i32 to vector<128x1xi32>
    %55 = arith.addi %21, %54 : vector<128x1xi32>
    %c0_i32_14 = arith.constant 0 : i32
    %56 = vector.broadcast %c0_i32_14 : i32 to vector<128x1xi32>
    %57 = arith.cmpi sge, %55, %56 : vector<128x1xi32>
    %c128_i32_15 = arith.constant 128 : i32
    %58 = vector.broadcast %c128_i32_15 : i32 to vector<128x1xi32>
    %59 = arith.cmpi slt, %55, %58 : vector<128x1xi32>
    %60 = arith.andi %57, %59 : vector<128x1xi1>
    %cst_16 = arith.constant 0.000000e+00 : f32
    %61 = vector.broadcast %cst_16 : f32 to vector<128x1xf32>
    %62 = arith.select %60, %53, %61 : vector<128x1xi1>, vector<128x1xf32>
    %c3 = arith.constant 3 : index
    %63 = memref.load %arg1[%c3] : memref<5xf32, #tpu.memory_space<smem>>
    %64 = vector.broadcast %63 : f32 to vector<128x1xf32>
    %65 = arith.mulf %64, %62 : vector<128x1xf32>
    %66 = arith.addf %52, %65 : vector<128x1xf32>
    %c126_i32 = arith.constant 126 : i32
    %67 = tpu.dynamic_rotate %4 by %c126_i32 dim 0 : vector<128x1xf32>, i32 -> vector<128x1xf32>
    %c2_i32_17 = arith.constant 2 : i32
    %68 = vector.broadcast %c2_i32_17 : i32 to vector<128x1xi32>
    %69 = arith.addi %21, %68 : vector<128x1xi32>
    %c0_i32_18 = arith.constant 0 : i32
    %70 = vector.broadcast %c0_i32_18 : i32 to vector<128x1xi32>
    %71 = arith.cmpi sge, %69, %70 : vector<128x1xi32>
    %c128_i32_19 = arith.constant 128 : i32
    %72 = vector.broadcast %c128_i32_19 : i32 to vector<128x1xi32>
    %73 = arith.cmpi slt, %69, %72 : vector<128x1xi32>
    %74 = arith.andi %71, %73 : vector<128x1xi1>
    %cst_20 = arith.constant 0.000000e+00 : f32
    %75 = vector.broadcast %cst_20 : f32 to vector<128x1xf32>
    %76 = arith.select %74, %67, %75 : vector<128x1xi1>, vector<128x1xf32>
    %c4 = arith.constant 4 : index
    %77 = memref.load %arg1[%c4] : memref<5xf32, #tpu.memory_space<smem>>
    %78 = vector.broadcast %77 : f32 to vector<128x1xf32>
    %79 = arith.mulf %78, %76 : vector<128x1xf32>
    %80 = arith.addf %66, %79 : vector<128x1xf32>
    %81 = arith.negf %80 : vector<128x1xf32>
    %82 = math.exp %81 : vector<128x1xf32>
    %cst_21 = arith.constant 1.000000e+00 : f32
    %83 = vector.broadcast %cst_21 : f32 to vector<128x1xf32>
    %84 = arith.addf %83, %82 : vector<128x1xf32>
    %85 = arith.divf %83, %84 : vector<128x1xf32>
    %86 = vector.broadcast %85 : vector<128x1xf32> to vector<128x64xf32>
    %87 = arith.mulf %0, %86 : vector<128x64xf32>
    %c0_22 = arith.constant 0 : index
    %c0_23 = arith.constant 0 : index
    %88 = vector.load %arg3[%c0_22, %c0_23] : memref<128x64xf32, #tpu.memory_space<vmem>>, vector<128x64xf32>
    tpu.vector_store %arg3[%c0_22, %c0_23], %87 {strides = array<i32>} : memref<128x64xf32, #tpu.memory_space<vmem>>, vector<128x64xf32>,
    return
  }
  func.func @transform_0(%arg0: i32) -> i32 {
    %c0_i32 = arith.constant 0 : i32
    %c0_i32_0 = arith.constant 0 : i32
    return %c0_i32 : i32
  }
  func.func @transform_1(%arg0: i32) -> (i32, i32) {
    %c0_i32 = arith.constant 0 : i32
    %c0_i32_0 = arith.constant 0 : i32
    return %arg0, %c0_i32 : i32, i32
  }
  func.func @transform_2(%arg0: i32) -> (i32, i32) {
    %c0_i32 = arith.constant 0 : i32
    %c0_i32_0 = arith.constant 0 : i32
    return %arg0, %c0_i32 : i32, i32
  }
}

</mosaic_0001>

<llo_original>
// kernel: tpu_custom_call.1
$region0: #{tpu_custom_call.1}
  #allocation0 [shape = 'u32[]', space=smem, size = 0x4, offset = 0x4, fixed_abs, tag = 'smem constant byte address 0x4 - core index']
  #allocation1 [shape = 'u32[72,128]{1,0:T(1,128)}', space=vmem, size = 0x9000, scoped, tag = 'internal scratch']
  %s0 = inlined_call_operand.vmem [shape: f32[5], index: 0, kind: input, shape index: {}]
  %s1 = inlined_call_operand.vmem [shape: f32[256,64], index: 1, kind: input, shape index: {}]
  %s2 = inlined_call_operand.vmem [shape: f32[256,64], index: 2, kind: output, shape index: {}]
  %s3 = sld [smem:[#allocation0]]
  $region45: #{tpu_custom_call.1} parent=0
    _
  %s5 = ssub.s32 1, %s3
  %s6 = scalar_select 0, %s5, %s3
  $region1: #{tpu_custom_call.1} parent=0
    #allocation2 [shape = 'u8[512]{0}', space=smem, size = 0x200, scoped, tag = 'input window, operand 0, single buffered']
    #allocation3 [shape = 's32[2]{0}', space=sflag, size = 0x8, scoped, tag = 'scoped memory for tpu_custom_call.1']
    %7 = vsyncpa [#allocation3], 0
    loop: start=0, step=1, limit=4
    $region2: #{tpu_custom_call.1} parent=1 // loop_pre_header
      _
    $region3: #{tpu_custom_call.1} parent=1 // loop_header
      %s9 = sphi 0, %s13
      %p10 = scmp.ge.s32.totalorder %s9, 4
      %s17 = sphi 0, %s17
      %s19 = sphi 0, %s17
      %s20 = sphi 0, %s19
      %s34 = sphi 0, %s20
      %s40 = sphi 0, %s42
      %s43 = sphi 0, %s40
      %s44 = sphi 0, %s43
      %s60 = sphi 0, %s44
      %s66 = sphi 0, %s68
      %s69 = sphi 0, %s66
      %s70 = sphi 0, %s69
      %s86 = sphi 0, %s70
    $region4: #{tpu_custom_call.1} parent=1 // loop_header_branch
      %12 = sbr.rel (%p10) target = $region8
    $region5: #{tpu_custom_call.1} parent=1 // loop_body
      %s14 = ssub.s32 %s9, 1
      %s15 = ssub.s32 %s9, 2
      %s16 = sadd.s32 %s9, 1
      %s18 = sadd.s32 %s17, 1
      %p21 = scmp.eq.s32.totalorder %s9, 1
      %p22 = scmp.ne.s32.totalorder %s17, %s19
      %p23 = scmp.eq.s32.totalorder %s9, 0
      %p24 = por %p22, %p23
      %p25 = scmp.ne.s32.totalorder %s17, %s19
      %p26 = scmp.eq.s32.totalorder %s14, 1
      %p27 = por %p25, %p26
      %p28 = scmp.ne.s32.totalorder %s19, %s20
      %p29 = scmp.eq.s32.totalorder %s14, 0
      %p30 = por %p28, %p29
      %p31 = scmp.ne.s32.totalorder %s19, %s20
      %p32 = scmp.eq.s32.totalorder %s15, 1
      %p33 = por %p31, %p32
      %p35 = scmp.ne.s32.totalorder %s20, %s34
      %p36 = scmp.eq.s32.totalorder %s15, 0
      %p37 = por %p35, %p36
      %s38 = ssub.s32 %s9, %s16
      %p39 = scmp.eq.s32.totalorder %s38, 0
      %s41 = sadd.s32 %s40, 1
      %s42 = scalar_select %p39, %s40, %s41
      %p45 = pneg %p39
      %p46 = scmp.eq.s32.totalorder %s9, 1
      %p47 = por %p45, %p46
      %p48 = scmp.ne.s32.totalorder %s40, %s43
      %p49 = scmp.eq.s32.totalorder %s9, 0
      %p50 = por %p48, %p49
      %p51 = scmp.ne.s32.totalorder %s40, %s43
      %p52 = scmp.eq.s32.totalorder %s14, 1
      %p53 = por %p51, %p52
      %p54 = scmp.ne.s32.totalorder %s43, %s44
      %p55 = scmp.eq.s32.totalorder %s14, 0
      %p56 = por %p54, %p55
      %p57 = scmp.ne.s32.totalorder %s43, %s44
      %p58 = scmp.eq.s32.totalorder %s15, 1
      %p59 = por %p57, %p58
      %p61 = scmp.ne.s32.totalorder %s44, %s60
      %p62 = scmp.eq.s32.totalorder %s15, 0
      %p63 = por %p61, %p62
      %s64 = ssub.s32 %s9, %s16
      %p65 = scmp.eq.s32.totalorder %s64, 0
      %s67 = sadd.s32 %s66, 1
      %s68 = scalar_select %p65, %s66, %s67
      %p71 = pneg %p65
      %p72 = scmp.eq.s32.totalorder %s9, 1
      %p73 = por %p71, %p72
      %p74 = scmp.ne.s32.totalorder %s66, %s69
      %p75 = scmp.eq.s32.totalorder %s9, 0
      %p76 = por %p74, %p75
      %p77 = scmp.ne.s32.totalorder %s66, %s69
      %p78 = scmp.eq.s32.totalorder %s14, 1
      %p79 = por %p77, %p78
      %p80 = scmp.ne.s32.totalorder %s69, %s70
      %p81 = scmp.eq.s32.totalorder %s14, 0
      %p82 = por %p80, %p81
      %p83 = scmp.ne.s32.totalorder %s69, %s70
      %p84 = scmp.eq.s32.totalorder %s15, 1
      %p85 = por %p83, %p84
      %p87 = scmp.ne.s32.totalorder %s70, %s86
      %p88 = scmp.eq.s32.totalorder %s15, 0
      %p89 = por %p87, %p88
      %p90 = scmp.le.s32.totalorder 1, %s9
      %p91 = scmp.lt.s32.totalorder %s9, 3
      %p92 = pnand %p90, %p91
      %p93 = pneg %p92
      // Predicated region
      $region9: #{tpu_custom_call.1} parent=5 // pred_check
        _
      $region10: #{tpu_custom_call.1} parent=5 // pred_check_branch
        %95 = sbr.rel (%p92) target = $region12
      $region11: #{tpu_custom_call.1} parent=5 // pred_region
        %s96 = ssub.s32 %s9, 1
        // Predicated region
        $region13: #{tpu_custom_call.1} parent=11 // pred_check
          %p97 = pneg %p30
        $region14: #{tpu_custom_call.1} parent=11 // pred_check_branch
          %99 = sbr.rel (%p97) target = $region16
        $region15: #{tpu_custom_call.1} parent=11 // pred_region
          %101 = vsyncadd [#allocation3], 0
          %s103 = sshll.u32 %s0, 4
          %s104 = int_to_ptr.vmem [resolvable:$true] %s103
          %106 = dma.vmem_to_smem %s104, 16, [#allocation2], [#allocation3]
        $region16: #{tpu_custom_call.1} parent=11 // pred_fallthru
          _
      $region12: #{tpu_custom_call.1} parent=5 // pred_fallthru
        _
      %p107 = scmp.lt.s32.totalorder %s9, 2
      // Predicated region
      $region17: #{tpu_custom_call.1} parent=5 // pred_check
        %p108 = pneg %p107
      $region18: #{tpu_custom_call.1} parent=5 // pred_check_branch
        %110 = sbr.rel (%p108) target = $region20
      $region19: #{tpu_custom_call.1} parent=5 // pred_region
        // Predicated region
        $region21: #{tpu_custom_call.1} parent=19 // pred_check
          %p111 = pneg %p50
        $region22: #{tpu_custom_call.1} parent=19 // pred_check_branch
          %113 = sbr.rel (%p111) target = $region24
        $region23: #{tpu_custom_call.1} parent=19 // pred_region
          %s114 = smul.u32 16, %s9
          %p115 = scmp.lt.s32.totalorder %s114, 31
          %s116 = scalar_select %p115, %s114, 31
          %s117 = smul.addr %s116, 8
          %s118 = scalar_lea.vmem %s1, %s117
          %s119 = smul.u32 16, %s9
        $region24: #{tpu_custom_call.1} parent=19 // pred_fallthru
          _
      $region20: #{tpu_custom_call.1} parent=5 // pred_fallthru
        _
      %p120 = scmp.le.s32.totalorder 1, %s9
      %p121 = scmp.lt.s32.totalorder %s9, 3
      %p122 = pnand %p120, %p121
      %p123 = pneg %p122
      // Predicated region
      $region25: #{tpu_custom_call.1} parent=5 // pred_check
        _
      $region26: #{tpu_custom_call.1} parent=5 // pred_check_branch
        %125 = sbr.rel (%p122) target = $region28
      $region27: #{tpu_custom_call.1} parent=5 // pred_region
        %s126 = ssub.s32 %s9, 1
        // Predicated region
        $region29: #{tpu_custom_call.1} parent=27 // pred_check
          %p127 = pneg %p30
        $region30: #{tpu_custom_call.1} parent=27 // pred_check_branch
          %129 = sbr.rel (%p127) target = $region32
        $region31: #{tpu_custom_call.1} parent=27 // pred_region
          %131 = dma.done [#allocation3], 16
        $region32: #{tpu_custom_call.1} parent=27 // pred_fallthru
          _
        %132 = sfence
        %p133 = pneg %p30
        %p134 = pneg %p27
        %s135 = smul.u32 16, %s14
        %p136 = scmp.lt.s32.totalorder %s135, 31
        %s137 = scalar_select %p136, %s135, 31
        %s138 = smul.addr %s137, 8
        %s139 = scalar_lea.vmem %s1, %s138
        %p140 = pneg %p56
        %p141 = pneg %p53
        %p142 = pneg %p82
        %p143 = pneg %p79
        %s144 = smul.u32 16, %s14
        %p145 = scmp.lt.s32.totalorder %s144, 31
        %s146 = scalar_select %p145, %s144, 31
        %s147 = smul.addr %s146, 8
        %s148 = scalar_lea.vmem %s2, %s147
        %s149 = smul.u32 16, %s14
        %p150 = scmp.lt.s32.totalorder %s149, 31
        %s151 = scalar_select %p150, %s149, 31
        %s152 = smul.addr %s151, 8
        %s153 = scalar_lea.vmem %s1, %s152
        %s154 = smul.u32 16, %s14
        %s155 = smul.u32 16, %s14
        %p156 = scmp.lt.s32.totalorder %s155, 31
        %s157 = scalar_select %p156, %s155, 31
        %s158 = smul.addr %s157, 8
        %s159 = scalar_lea.vmem %s2, %s158
        %s160 = smul.u32 16, %s14
        %v161 = vld [vmem:[%s153] sm:$0xff]
        %v162 = vld [vmem:[%s153 + $0x8] sm:$0xff]
        %v163 = vld [vmem:[%s153 + $0x10] sm:$0xff]
        %v164 = vld [vmem:[%s153 + $0x18] sm:$0xff]
        %v165 = vld [vmem:[%s153 + $0x20] sm:$0xff]
        %v166 = vld [vmem:[%s153 + $0x28] sm:$0xff]
        %v167 = vld [vmem:[%s153 + $0x30] sm:$0xff]
        %v168 = vld [vmem:[%s153 + $0x38] sm:$0xff]
        %v169 = vld [vmem:[%s153 + $0x40] sm:$0xff]
        %v170 = vld [vmem:[%s153 + $0x48] sm:$0xff]
        %v171 = vld [vmem:[%s153 + $0x50] sm:$0xff]
        %v172 = vld [vmem:[%s153 + $0x58] sm:$0xff]
        %v173 = vld [vmem:[%s153 + $0x60] sm:$0xff]
        %v174 = vld [vmem:[%s153 + $0x68] sm:$0xff]
        %v175 = vld [vmem:[%s153 + $0x70] sm:$0xff]
        %v176 = vld [vmem:[%s153 + $0x78] sm:$0xff]
        %vm177 = vcmask 523264
        %v178 = vsel %vm177, %v161, 0.0
        %179 = vadd.xlane.f32.xlu0 %v178
        %v180 = vpop.xlane.xlu0 %179
        %v181 = vsel %vm177, %v162, 0.0
        %182 = vadd.xlane.f32.xlu0 %v181
        %v183 = vpop.xlane.xlu0 %182
        %v184 = vsel %vm177, %v163, 0.0
        %185 = vadd.xlane.f32.xlu0 %v184
        %v186 = vpop.xlane.xlu0 %185
        %v187 = vsel %vm177, %v164, 0.0
        %188 = vadd.xlane.f32.xlu0 %v187
        %v189 = vpop.xlane.xlu0 %188
        %v190 = vsel %vm177, %v165, 0.0
        %191 = vadd.xlane.f32.xlu0 %v190
        %v192 = vpop.xlane.xlu0 %191
        %v193 = vsel %vm177, %v166, 0.0
        %194 = vadd.xlane.f32.xlu0 %v193
        %v195 = vpop.xlane.xlu0 %194
        %v196 = vsel %vm177, %v167, 0.0
        %197 = vadd.xlane.f32.xlu0 %v196
        %v198 = vpop.xlane.xlu0 %197
        %v199 = vsel %vm177, %v168, 0.0
        %200 = vadd.xlane.f32.xlu0 %v199
        %v201 = vpop.xlane.xlu0 %200
        %v202 = vsel %vm177, %v169, 0.0
        %203 = vadd.xlane.f32.xlu0 %v202
        %v204 = vpop.xlane.xlu0 %203
        %v205 = vsel %vm177, %v170, 0.0
        %206 = vadd.xlane.f32.xlu0 %v205
        %v207 = vpop.xlane.xlu0 %206
        %v208 = vsel %vm177, %v171, 0.0
        %209 = vadd.xlane.f32.xlu0 %v208
        %v210 = vpop.xlane.xlu0 %209
        %v211 = vsel %vm177, %v172, 0.0
        %212 = vadd.xlane.f32.xlu0 %v211
        %v213 = vpop.xlane.xlu0 %212
        %v214 = vsel %vm177, %v173, 0.0
        %215 = vadd.xlane.f32.xlu0 %v214
        %v216 = vpop.xlane.xlu0 %215
        %v217 = vsel %vm177, %v174, 0.0
        %218 = vadd.xlane.f32.xlu0 %v217
        %v219 = vpop.xlane.xlu0 %218
        %v220 = vsel %vm177, %v175, 0.0
        %221 = vadd.xlane.f32.xlu0 %v220
        %v222 = vpop.xlane.xlu0 %221
        %v223 = vsel %vm177, %v176, 0.0
        %224 = vadd.xlane.f32.xlu0 %v223
        %v225 = vpop.xlane.xlu0 %224
        %v226 = vmul.f32 %v180, 0.015625
        %v227 = vmul.f32 %v183, 0.015625
        %v228 = vmul.f32 %v186, 0.015625
        %v229 = vmul.f32 %v189, 0.015625
        %v230 = vmul.f32 %v192, 0.015625
        %v231 = vmul.f32 %v195, 0.015625
        %v232 = vmul.f32 %v198, 0.015625
        %v233 = vmul.f32 %v201, 0.015625
        %v234 = vmul.f32 %v204, 0.015625
        %v235 = vmul.f32 %v207, 0.015625
        %v236 = vmul.f32 %v210, 0.015625
        %v237 = vmul.f32 %v213, 0.015625
        %v238 = vmul.f32 %v216, 0.015625
        %v239 = vmul.f32 %v219, 0.015625
        %v240 = vmul.f32 %v222, 0.015625
        %v241 = vmul.f32 %v225, 0.015625
        %v242 = vlaneseq
        %v243 = vshrl.u32 %v242, 7
        %v244 = vadd.s32 %v243, 8
        %v245 = vadd.s32 %v243, 16
        %v246 = vadd.s32 %v243, 24
        %v247 = vadd.s32 %v243, 32
        %v248 = vadd.s32 %v243, 40
        %v249 = vadd.s32 %v243, 48
        %v250 = vadd.s32 %v243, 56
        %v251 = vadd.s32 %v243, 64
        %v252 = vadd.s32 %v243, 72
        %v253 = vadd.s32 %v243, 80
        %v254 = vadd.s32 %v243, 88
        %v255 = vadd.s32 %v243, 96
        %v256 = vadd.s32 %v243, 104
        %v257 = vadd.s32 %v243, 112
        %v258 = vadd.s32 %v243, 120
        %vm259 = vcmp.lt.s32.totalorder %v243, 0
        %v260 = vsub.s32 0, %v243
        %v261 = vsel %vm259, %v260, %v243
        %v262 = vshrl.u32 %v261, 7
        %v263 = vand.u32 %v261, 127
        %v264 = vsub.s32 0, %v263
        %v265 = vsel %vm259, %v264, %v263
        %vm266 = vcmp.lt.s32.totalorder %v244, 0
        %v267 = vsub.s32 0, %v244
        %v268 = vsel %vm266, %v267, %v244
        %v269 = vshrl.u32 %v268, 7
        %v270 = vand.u32 %v268, 127
        %v271 = vsub.s32 0, %v270
        %v272 = vsel %vm266, %v271, %v270
        %vm273 = vcmp.lt.s32.totalorder %v245, 0
        %v274 = vsub.s32 0, %v245
        %v275 = vsel %vm273, %v274, %v245
        %v276 = vshrl.u32 %v275, 7
        %v277 = vand.u32 %v275, 127
        %v278 = vsub.s32 0, %v277
        %v279 = vsel %vm273, %v278, %v277
        %vm280 = vcmp.lt.s32.totalorder %v246, 0
        %v281 = vsub.s32 0, %v246
        %v282 = vsel %vm280, %v281, %v246
        %v283 = vshrl.u32 %v282, 7
        %v284 = vand.u32 %v282, 127
        %v285 = vsub.s32 0, %v284
        %v286 = vsel %vm280, %v285, %v284
        %vm287 = vcmp.lt.s32.totalorder %v247, 0
        %v288 = vsub.s32 0, %v247
        %v289 = vsel %vm287, %v288, %v247
        %v290 = vshrl.u32 %v289, 7
        %v291 = vand.u32 %v289, 127
        %v292 = vsub.s32 0, %v291
        %v293 = vsel %vm287, %v292, %v291
        %vm294 = vcmp.lt.s32.totalorder %v248, 0
        %v295 = vsub.s32 0, %v248
        %v296 = vsel %vm294, %v295, %v248
        %v297 = vshrl.u32 %v296, 7
        %v298 = vand.u32 %v296, 127
        %v299 = vsub.s32 0, %v298
        %v300 = vsel %vm294, %v299, %v298
        %vm301 = vcmp.lt.s32.totalorder %v249, 0
        %v302 = vsub.s32 0, %v249
        %v303 = vsel %vm301, %v302, %v249
        %v304 = vshrl.u32 %v303, 7
        %v305 = vand.u32 %v303, 127
        %v306 = vsub.s32 0, %v305
        %v307 = vsel %vm301, %v306, %v305
        %vm308 = vcmp.lt.s32.totalorder %v250, 0
        %v309 = vsub.s32 0, %v250
        %v310 = vsel %vm308, %v309, %v250
        %v311 = vshrl.u32 %v310, 7
        %v312 = vand.u32 %v310, 127
        %v313 = vsub.s32 0, %v312
        %v314 = vsel %vm308, %v313, %v312
        %vm315 = vcmp.lt.s32.totalorder %v251, 0
        %v316 = vsub.s32 0, %v251
        %v317 = vsel %vm315, %v316, %v251
        %v318 = vshrl.u32 %v317, 7
        %v319 = vand.u32 %v317, 127
        %v320 = vsub.s32 0, %v319
        %v321 = vsel %vm315, %v320, %v319
        %vm322 = vcmp.lt.s32.totalorder %v252, 0
        %v323 = vsub.s32 0, %v252
        %v324 = vsel %vm322, %v323, %v252
        %v325 = vshrl.u32 %v324, 7
        %v326 = vand.u32 %v324, 127
        %v327 = vsub.s32 0, %v326
        %v328 = vsel %vm322, %v327, %v326
        %vm329 = vcmp.lt.s32.totalorder %v253, 0
        %v330 = vsub.s32 0, %v253
        %v331 = vsel %vm329, %v330, %v253
        %v332 = vshrl.u32 %v331, 7
        %v333 = vand.u32 %v331, 127
        %v334 = vsub.s32 0, %v333
        %v335 = vsel %vm329, %v334, %v333
        %vm336 = vcmp.lt.s32.totalorder %v254, 0
        %v337 = vsub.s32 0, %v254
        %v338 = vsel %vm336, %v337, %v254
        %v339 = vshrl.u32 %v338, 7
        %v340 = vand.u32 %v338, 127
        %v341 = vsub.s32 0, %v340
        %v342 = vsel %vm336, %v341, %v340
        %vm343 = vcmp.lt.s32.totalorder %v255, 0
        %v344 = vsub.s32 0, %v255
        %v345 = vsel %vm343, %v344, %v255
        %v346 = vshrl.u32 %v345, 7
        %v347 = vand.u32 %v345, 127
        %v348 = vsub.s32 0, %v347
        %v349 = vsel %vm343, %v348, %v347
        %vm350 = vcmp.lt.s32.totalorder %v256, 0
        %v351 = vsub.s32 0, %v256
        %v352 = vsel %vm350, %v351, %v256
        %v353 = vshrl.u32 %v352, 7
        %v354 = vand.u32 %v352, 127
        %v355 = vsub.s32 0, %v354
        %v356 = vsel %vm350, %v355, %v354
        %vm357 = vcmp.lt.s32.totalorder %v257, 0
        %v358 = vsub.s32 0, %v257
        %v359 = vsel %vm357, %v358, %v257
        %v360 = vshrl.u32 %v359, 7
        %v361 = vand.u32 %v359, 127
        %v362 = vsub.s32 0, %v361
        %v363 = vsel %vm357, %v362, %v361
        %vm364 = vcmp.lt.s32.totalorder %v258, 0
        %v365 = vsub.s32 0, %v258
        %v366 = vsel %vm364, %v365, %v258
        %v367 = vshrl.u32 %v366, 7
        %v368 = vand.u32 %v366, 127
        %v369 = vsub.s32 0, %v368
        %v370 = vsel %vm364, %v369, %v368
        %vm371 = vcmp.ne.s32.totalorder %v265, 0
        %vm372 = vcmp.ne.s32.totalorder %v272, 0
        %vm373 = vcmp.ne.s32.totalorder %v279, 0
        %vm374 = vcmp.ne.s32.totalorder %v286, 0
        %vm375 = vcmp.ne.s32.totalorder %v293, 0
        %vm376 = vcmp.ne.s32.totalorder %v300, 0
        %vm377 = vcmp.ne.s32.totalorder %v307, 0
        %vm378 = vcmp.ne.s32.totalorder %v314, 0
        %vm379 = vcmp.ne.s32.totalorder %v321, 0
        %vm380 = vcmp.ne.s32.totalorder %v328, 0
        %vm381 = vcmp.ne.s32.totalorder %v335, 0
        %vm382 = vcmp.ne.s32.totalorder %v342, 0
        %vm383 = vcmp.ne.s32.totalorder %v349, 0
        %vm384 = vcmp.ne.s32.totalorder %v356, 0
        %vm385 = vcmp.ne.s32.totalorder %v363, 0
        %vm386 = vcmp.ne.s32.totalorder %v370, 0
        %vm387 = vcmp.lt.s32.totalorder %v265, 0
        %vm388 = vcmp.lt.s32.totalorder %v272, 0
        %vm389 = vcmp.lt.s32.totalorder %v279, 0
        %vm390 = vcmp.lt.s32.totalorder %v286, 0
        %vm391 = vcmp.lt.s32.totalorder %v293, 0
        %vm392 = vcmp.lt.s32.totalorder %v300, 0
        %vm393 = vcmp.lt.s32.totalorder %v307, 0
        %vm394 = vcmp.lt.s32.totalorder %v314, 0
        %vm395 = vcmp.lt.s32.totalorder %v321, 0
        %vm396 = vcmp.lt.s32.totalorder %v328, 0
        %vm397 = vcmp.lt.s32.totalorder %v335, 0
        %vm398 = vcmp.lt.s32.totalorder %v342, 0
        %vm399 = vcmp.lt.s32.totalorder %v349, 0
        %vm400 = vcmp.lt.s32.totalorder %v356, 0
        %vm401 = vcmp.lt.s32.totalorder %v363, 0
        %vm402 = vcmp.lt.s32.totalorder %v370, 0
        %vm403 = vmand %vm387, %vm371
        %vm404 = vmand %vm388, %vm372
        %vm405 = vmand %vm389, %vm373
        %vm406 = vmand %vm390, %vm374
        %vm407 = vmand %vm391, %vm375
        %vm408 = vmand %vm392, %vm376
        %vm409 = vmand %vm393, %vm377
        %vm410 = vmand %vm394, %vm378
        %vm411 = vmand %vm395, %vm379
        %vm412 = vmand %vm396, %vm380
        %vm413 = vmand %vm397, %vm381
        %vm414 = vmand %vm398, %vm382
        %vm415 = vmand %vm399, %vm383
        %vm416 = vmand %vm400, %vm384
        %vm417 = vmand %vm401, %vm385
        %vm418 = vmand %vm402, %vm386
        %v419 = vadd.s32 %v265, 128
        %v420 = vadd.s32 %v272, 128
        %v421 = vadd.s32 %v279, 128
        %v422 = vadd.s32 %v286, 128
        %v423 = vadd.s32 %v293, 128
        %v424 = vadd.s32 %v300, 128
        %v425 = vadd.s32 %v307, 128
        %v426 = vadd.s32 %v314, 128
        %v427 = vadd.s32 %v321, 128
        %v428 = vadd.s32 %v328, 128
        %v429 = vadd.s32 %v335, 128
        %v430 = vadd.s32 %v342, 128
        %v431 = vadd.s32 %v349, 128
        %v432 = vadd.s32 %v356, 128
        %v433 = vadd.s32 %v363, 128
        %v434 = vadd.s32 %v370, 128
        %v435 = vsel %vm403, %v419, %v265
        %v436 = vsel %vm404, %v420, %v272
        %v437 = vsel %vm405, %v421, %v279
        %v438 = vsel %vm406, %v422, %v286
        %v439 = vsel %vm407, %v423, %v293
        %v440 = vsel %vm408, %v424, %v300
        %v441 = vsel %vm409, %v425, %v307
        %v442 = vsel %vm410, %v426, %v314
        %v443 = vsel %vm411, %v427, %v321
        %v444 = vsel %vm412, %v428, %v328
        %v445 = vsel %vm413, %v429, %v335
        %v446 = vsel %vm414, %v430, %v342
        %v447 = vsel %vm415, %v431, %v349
        %v448 = vsel %vm416, %v432, %v356
        %v449 = vsel %vm417, %v433, %v363
        %v450 = vsel %vm418, %v434, %v370
        %s451 = sld [smem:[#allocation2 + $0x2]]
        %v452 = vstv %s451
        %v453 = vmul.f32 %v452, %v226
        %v454 = vmul.f32 %v452, %v227
        %v455 = vmul.f32 %v452, %v228
        %v456 = vmul.f32 %v452, %v229
        %v457 = vmul.f32 %v452, %v230
        %v458 = vmul.f32 %v452, %v231
        %v459 = vmul.f32 %v452, %v232
        %v460 = vmul.f32 %v452, %v233
        %v461 = vmul.f32 %v452, %v234
        %v462 = vmul.f32 %v452, %v235
        %v463 = vmul.f32 %v452, %v236
        %v464 = vmul.f32 %v452, %v237
        %v465 = vmul.f32 %v452, %v238
        %v466 = vmul.f32 %v452, %v239
        %v467 = vmul.f32 %v452, %v240
        %v468 = vmul.f32 %v452, %v241
        %v469 = vrot.slane %v226, 6
        %v470 = vrot.slane %v227, 6
        %v471 = vrot.slane %v228, 6
        %v472 = vrot.slane %v229, 6
        %v473 = vrot.slane %v230, 6
        %v474 = vrot.slane %v231, 6
        %v475 = vrot.slane %v232, 6
        %v476 = vrot.slane %v233, 6
        %v477 = vrot.slane %v234, 6
        %v478 = vrot.slane %v235, 6
        %v479 = vrot.slane %v236, 6
        %v480 = vrot.slane %v237, 6
        %v481 = vrot.slane %v238, 6
        %v482 = vrot.slane %v239, 6
        %v483 = vrot.slane %v240, 6
        %v484 = vrot.slane %v241, 6
        %vm485 = vcmp.lt.s32.totalorder %v243, 2
        %v486 = vsel %vm485, %v483, %v484
        %v487 = vsel %vm485, %v482, %v483
        %v488 = vsel %vm485, %v481, %v482
        %v489 = vsel %vm485, %v480, %v481
        %v490 = vsel %vm485, %v479, %v480
        %v491 = vsel %vm485, %v478, %v479
        %v492 = vsel %vm485, %v477, %v478
        %v493 = vsel %vm485, %v476, %v477
        %v494 = vsel %vm485, %v475, %v476
        %v495 = vsel %vm485, %v474, %v475
        %v496 = vsel %vm485, %v473, %v474
        %v497 = vsel %vm485, %v472, %v473
        %v498 = vsel %vm485, %v471, %v472
        %v499 = vsel %vm485, %v470, %v471
        %v500 = vsel %vm485, %v469, %v470
        %v501 = vsel %vm485, %v484, %v469
        %v502 = vadd.s32 %v435, 4294967294
        %v503 = vadd.s32 %v436, 4294967294
        %v504 = vadd.s32 %v437, 4294967294
        %v505 = vadd.s32 %v438, 4294967294
        %v506 = vadd.s32 %v439, 4294967294
        %v507 = vadd.s32 %v440, 4294967294
        %v508 = vadd.s32 %v441, 4294967294
        %v509 = vadd.s32 %v442, 4294967294
        %v510 = vadd.s32 %v443, 4294967294
        %v511 = vadd.s32 %v444, 4294967294
        %v512 = vadd.s32 %v445, 4294967294
        %v513 = vadd.s32 %v446, 4294967294
        %v514 = vadd.s32 %v447, 4294967294
        %v515 = vadd.s32 %v448, 4294967294
        %v516 = vadd.s32 %v449, 4294967294
        %v517 = vadd.s32 %v450, 4294967294
        %vm518 = vcmp.ge.s32.totalorder %v502, 0
        %vm519 = vcmp.ge.s32.totalorder %v503, 0
        %vm520 = vcmp.ge.s32.totalorder %v504, 0
        %vm521 = vcmp.ge.s32.totalorder %v505, 0
        %vm522 = vcmp.ge.s32.totalorder %v506, 0
        %vm523 = vcmp.ge.s32.totalorder %v507, 0
        %vm524 = vcmp.ge.s32.totalorder %v508, 0
        %vm525 = vcmp.ge.s32.totalorder %v509, 0
        %vm526 = vcmp.ge.s32.totalorder %v510, 0
        %vm527 = vcmp.ge.s32.totalorder %v511, 0
        %vm528 = vcmp.ge.s32.totalorder %v512, 0
        %vm529 = vcmp.ge.s32.totalorder %v513, 0
        %vm530 = vcmp.ge.s32.totalorder %v514, 0
        %vm531 = vcmp.ge.s32.totalorder %v515, 0
        %vm532 = vcmp.ge.s32.totalorder %v516, 0
        %vm533 = vcmp.ge.s32.totalorder %v517, 0
        %vm534 = vcmp.lt.s32.totalorder %v502, 128
        %vm535 = vcmp.lt.s32.totalorder %v503, 128
        %vm536 = vcmp.lt.s32.totalorder %v504, 128
        %vm537 = vcmp.lt.s32.totalorder %v505, 128
        %vm538 = vcmp.lt.s32.totalorder %v506, 128
        %vm539 = vcmp.lt.s32.totalorder %v507, 128
        %vm540 = vcmp.lt.s32.totalorder %v508, 128
        %vm541 = vcmp.lt.s32.totalorder %v509, 128
        %vm542 = vcmp.lt.s32.totalorder %v510, 128
        %vm543 = vcmp.lt.s32.totalorder %v511, 128
        %vm544 = vcmp.lt.s32.totalorder %v512, 128
        %vm545 = vcmp.lt.s32.totalorder %v513, 128
        %vm546 = vcmp.lt.s32.totalorder %v514, 128
        %vm547 = vcmp.lt.s32.totalorder %v515, 128
        %vm548 = vcmp.lt.s32.totalorder %v516, 128
        %vm549 = vcmp.lt.s32.totalorder %v517, 128
        %vm550 = vmand %vm518, %vm534
        %vm551 = vmand %vm519, %vm535
        %vm552 = vmand %vm520, %vm536
        %vm553 = vmand %vm521, %vm537
        %vm554 = vmand %vm522, %vm538
        %vm555 = vmand %vm523, %vm539
        %vm556 = vmand %vm524, %vm540
        %vm557 = vmand %vm525, %vm541
        %vm558 = vmand %vm526, %vm542
        %vm559 = vmand %vm527, %vm543
        %vm560 = vmand %vm528, %vm544
        %vm561 = vmand %vm529, %vm545
        %vm562 = vmand %vm530, %vm546
        %vm563 = vmand %vm531, %vm547
        %vm564 = vmand %vm532, %vm548
        %vm565 = vmand %vm533, %vm549
        %v566 = vsel %vm550, %v501, 0.0
        %v567 = vsel %vm551, %v500, 0.0
        %v568 = vsel %vm552, %v499, 0.0
        %v569 = vsel %vm553, %v498, 0.0
        %v570 = vsel %vm554, %v497, 0.0
        %v571 = vsel %vm555, %v496, 0.0
        %v572 = vsel %vm556, %v495, 0.0
        %v573 = vsel %vm557, %v494, 0.0
        %v574 = vsel %vm558, %v493, 0.0
        %v575 = vsel %vm559, %v492, 0.0
        %v576 = vsel %vm560, %v491, 0.0
        %v577 = vsel %vm561, %v490, 0.0
        %v578 = vsel %vm562, %v489, 0.0
        %v579 = vsel %vm563, %v488, 0.0
        %v580 = vsel %vm564, %v487, 0.0
        %v581 = vsel %vm565, %v486, 0.0
        %s582 = sld [smem:[#allocation2]]
        %v583 = vstv %s582
        %v584 = vmul.f32 %v583, %v566
        %v585 = vmul.f32 %v583, %v567
        %v586 = vmul.f32 %v583, %v568
        %v587 = vmul.f32 %v583, %v569
        %v588 = vmul.f32 %v583, %v570
        %v589 = vmul.f32 %v583, %v571
        %v590 = vmul.f32 %v583, %v572
        %v591 = vmul.f32 %v583, %v573
        %v592 = vmul.f32 %v583, %v574
        %v593 = vmul.f32 %v583, %v575
        %v594 = vmul.f32 %v583, %v576
        %v595 = vmul.f32 %v583, %v577
        %v596 = vmul.f32 %v583, %v578
        %v597 = vmul.f32 %v583, %v579
        %v598 = vmul.f32 %v583, %v580
        %v599 = vmul.f32 %v583, %v581
        %v600 = vadd.f32 %v453, %v584
        %v601 = vadd.f32 %v454, %v585
        %v602 = vadd.f32 %v455, %v586
        %v603 = vadd.f32 %v456, %v587
        %v604 = vadd.f32 %v457, %v588
        %v605 = vadd.f32 %v458, %v589
        %v606 = vadd.f32 %v459, %v590
        %v607 = vadd.f32 %v460, %v591
        %v608 = vadd.f32 %v461, %v592
        %v609 = vadd.f32 %v462, %v593
        %v610 = vadd.f32 %v463, %v594
        %v611 = vadd.f32 %v464, %v595
        %v612 = vadd.f32 %v465, %v596
        %v613 = vadd.f32 %v466, %v597
        %v614 = vadd.f32 %v467, %v598
        %v615 = vadd.f32 %v468, %v599
        %v616 = vrot.slane %v226, 7
        %v617 = vrot.slane %v227, 7
        %v618 = vrot.slane %v228, 7
        %v619 = vrot.slane %v229, 7
        %v620 = vrot.slane %v230, 7
        %v621 = vrot.slane %v231, 7
        %v622 = vrot.slane %v232, 7
        %v623 = vrot.slane %v233, 7
        %v624 = vrot.slane %v234, 7
        %v625 = vrot.slane %v235, 7
        %v626 = vrot.slane %v236, 7
        %v627 = vrot.slane %v237, 7
        %v628 = vrot.slane %v238, 7
        %v629 = vrot.slane %v239, 7
        %v630 = vrot.slane %v240, 7
        %v631 = vrot.slane %v241, 7
        %vm632 = vcmp.lt.s32.totalorder %v243, 1
        %v633 = vsel %vm632, %v630, %v631
        %v634 = vsel %vm632, %v629, %v630
        %v635 = vsel %vm632, %v628, %v629
        %v636 = vsel %vm632, %v627, %v628
        %v637 = vsel %vm632, %v626, %v627
        %v638 = vsel %vm632, %v625, %v626
        %v639 = vsel %vm632, %v624, %v625
        %v640 = vsel %vm632, %v623, %v624
        %v641 = vsel %vm632, %v622, %v623
        %v642 = vsel %vm632, %v621, %v622
        %v643 = vsel %vm632, %v620, %v621
        %v644 = vsel %vm632, %v619, %v620
        %v645 = vsel %vm632, %v618, %v619
        %v646 = vsel %vm632, %v617, %v618
        %v647 = vsel %vm632, %v616, %v617
        %v648 = vsel %vm632, %v631, %v616
        %v649 = vadd.s32 %v435, 4294967295
        %v650 = vadd.s32 %v436, 4294967295
        %v651 = vadd.s32 %v437, 4294967295
        %v652 = vadd.s32 %v438, 4294967295
        %v653 = vadd.s32 %v439, 4294967295
        %v654 = vadd.s32 %v440, 4294967295
        %v655 = vadd.s32 %v441, 4294967295
        %v656 = vadd.s32 %v442, 4294967295
        %v657 = vadd.s32 %v443, 4294967295
        %v658 = vadd.s32 %v444, 4294967295
        %v659 = vadd.s32 %v445, 4294967295
        %v660 = vadd.s32 %v446, 4294967295
        %v661 = vadd.s32 %v447, 4294967295
        %v662 = vadd.s32 %v448, 4294967295
        %v663 = vadd.s32 %v449, 4294967295
        %v664 = vadd.s32 %v450, 4294967295
        %vm665 = vcmp.ge.s32.totalorder %v649, 0
        %vm666 = vcmp.ge.s32.totalorder %v650, 0
        %vm667 = vcmp.ge.s32.totalorder %v651, 0
        %vm668 = vcmp.ge.s32.totalorder %v652, 0
        %vm669 = vcmp.ge.s32.totalorder %v653, 0
        %vm670 = vcmp.ge.s32.totalorder %v654, 0
        %vm671 = vcmp.ge.s32.totalorder %v655, 0
        %vm672 = vcmp.ge.s32.totalorder %v656, 0
        %vm673 = vcmp.ge.s32.totalorder %v657, 0
        %vm674 = vcmp.ge.s32.totalorder %v658, 0
        %vm675 = vcmp.ge.s32.totalorder %v659, 0
        %vm676 = vcmp.ge.s32.totalorder %v660, 0
        %vm677 = vcmp.ge.s32.totalorder %v661, 0
        %vm678 = vcmp.ge.s32.totalorder %v662, 0
        %vm679 = vcmp.ge.s32.totalorder %v663, 0
        %vm680 = vcmp.ge.s32.totalorder %v664, 0
        %vm681 = vcmp.lt.s32.totalorder %v649, 128
        %vm682 = vcmp.lt.s32.totalorder %v650, 128
        %vm683 = vcmp.lt.s32.totalorder %v651, 128
        %vm684 = vcmp.lt.s32.totalorder %v652, 128
        %vm685 = vcmp.lt.s32.totalorder %v653, 128
        %vm686 = vcmp.lt.s32.totalorder %v654, 128
        %vm687 = vcmp.lt.s32.totalorder %v655, 128
        %vm688 = vcmp.lt.s32.totalorder %v656, 128
        %vm689 = vcmp.lt.s32.totalorder %v657, 128
        %vm690 = vcmp.lt.s32.totalorder %v658, 128
        %vm691 = vcmp.lt.s32.totalorder %v659, 128
        %vm692 = vcmp.lt.s32.totalorder %v660, 128
        %vm693 = vcmp.lt.s32.totalorder %v661, 128
        %vm694 = vcmp.lt.s32.totalorder %v662, 128
        %vm695 = vcmp.lt.s32.totalorder %v663, 128
        %vm696 = vcmp.lt.s32.totalorder %v664, 128
        %vm697 = vmand %vm665, %vm681
        %vm698 = vmand %vm666, %vm682
        %vm699 = vmand %vm667, %vm683
        %vm700 = vmand %vm668, %vm684
        %vm701 = vmand %vm669, %vm685
        %vm702 = vmand %vm670, %vm686
        %vm703 = vmand %vm671, %vm687
        %vm704 = vmand %vm672, %vm688
        %vm705 = vmand %vm673, %vm689
        %vm706 = vmand %vm674, %vm690
        %vm707 = vmand %vm675, %vm691
        %vm708 = vmand %vm676, %vm692
        %vm709 = vmand %vm677, %vm693
        %vm710 = vmand %vm678, %vm694
        %vm711 = vmand %vm679, %vm695
        %vm712 = vmand %vm680, %vm696
        %v713 = vsel %vm697, %v648, 0.0
        %v714 = vsel %vm698, %v647, 0.0
        %v715 = vsel %vm699, %v646, 0.0
        %v716 = vsel %vm700, %v645, 0.0
        %v717 = vsel %vm701, %v644, 0.0
        %v718 = vsel %vm702, %v643, 0.0
        %v719 = vsel %vm703, %v642, 0.0
        %v720 = vsel %vm704, %v641, 0.0
        %v721 = vsel %vm705, %v640, 0.0
        %v722 = vsel %vm706, %v639, 0.0
        %v723 = vsel %vm707, %v638, 0.0
        %v724 = vsel %vm708, %v637, 0.0
        %v725 = vsel %vm709, %v636, 0.0
        %v726 = vsel %vm710, %v635, 0.0
        %v727 = vsel %vm711, %v634, 0.0
        %v728 = vsel %vm712, %v633, 0.0
        %s729 = sld [smem:[#allocation2 + $0x1]]
        %v730 = vstv %s729
        %v731 = vmul.f32 %v730, %v713
        %v732 = vmul.f32 %v730, %v714
        %v733 = vmul.f32 %v730, %v715
        %v734 = vmul.f32 %v730, %v716
        %v735 = vmul.f32 %v730, %v717
        %v736 = vmul.f32 %v730, %v718
        %v737 = vmul.f32 %v730, %v719
        %v738 = vmul.f32 %v730, %v720
        %v739 = vmul.f32 %v730, %v721
        %v740 = vmul.f32 %v730, %v722
        %v741 = vmul.f32 %v730, %v723
        %v742 = vmul.f32 %v730, %v724
        %v743 = vmul.f32 %v730, %v725
        %v744 = vmul.f32 %v730, %v726
        %v745 = vmul.f32 %v730, %v727
        %v746 = vmul.f32 %v730, %v728
        %v747 = vadd.f32 %v600, %v731
        %v748 = vadd.f32 %v601, %v732
        %v749 = vadd.f32 %v602, %v733
        %v750 = vadd.f32 %v603, %v734
        %v751 = vadd.f32 %v604, %v735
        %v752 = vadd.f32 %v605, %v736
        %v753 = vadd.f32 %v606, %v737
        %v754 = vadd.f32 %v607, %v738
        %v755 = vadd.f32 %v608, %v739
        %v756 = vadd.f32 %v609, %v740
        %v757 = vadd.f32 %v610, %v741
        %v758 = vadd.f32 %v611, %v742
        %v759 = vadd.f32 %v612, %v743
        %v760 = vadd.f32 %v613, %v744
        %v761 = vadd.f32 %v614, %v745
        %v762 = vadd.f32 %v615, %v746
        %v763 = vrot.slane %v226, 1
        %v764 = vrot.slane %v227, 1
        %v765 = vrot.slane %v228, 1
        %v766 = vrot.slane %v229, 1
        %v767 = vrot.slane %v230, 1
        %v768 = vrot.slane %v231, 1
        %v769 = vrot.slane %v232, 1
        %v770 = vrot.slane %v233, 1
        %v771 = vrot.slane %v234, 1
        %v772 = vrot.slane %v235, 1
        %v773 = vrot.slane %v236, 1
        %v774 = vrot.slane %v237, 1
        %v775 = vrot.slane %v238, 1
        %v776 = vrot.slane %v239, 1
        %v777 = vrot.slane %v240, 1
        %v778 = vrot.slane %v241, 1
        %vm779 = vcmp.lt.s32.totalorder %v243, 7
        %v780 = vsel %vm779, %v777, %v778
        %v781 = vsel %vm779, %v776, %v777
        %v782 = vsel %vm779, %v775, %v776
        %v783 = vsel %vm779, %v774, %v775
        %v784 = vsel %vm779, %v773, %v774
        %v785 = vsel %vm779, %v772, %v773
        %v786 = vsel %vm779, %v771, %v772
        %v787 = vsel %vm779, %v770, %v771
        %v788 = vsel %vm779, %v769, %v770
        %v789 = vsel %vm779, %v768, %v769
        %v790 = vsel %vm779, %v767, %v768
        %v791 = vsel %vm779, %v766, %v767
        %v792 = vsel %vm779, %v765, %v766
        %v793 = vsel %vm779, %v764, %v765
        %v794 = vsel %vm779, %v763, %v764
        %v795 = vsel %vm779, %v778, %v763
        %v796 = vadd.s32 %v435, 1
        %v797 = vadd.s32 %v436, 1
        %v798 = vadd.s32 %v437, 1
        %v799 = vadd.s32 %v438, 1
        %v800 = vadd.s32 %v439, 1
        %v801 = vadd.s32 %v440, 1
        %v802 = vadd.s32 %v441, 1
        %v803 = vadd.s32 %v442, 1
        %v804 = vadd.s32 %v443, 1
        %v805 = vadd.s32 %v444, 1
        %v806 = vadd.s32 %v445, 1
        %v807 = vadd.s32 %v446, 1
        %v808 = vadd.s32 %v447, 1
        %v809 = vadd.s32 %v448, 1
        %v810 = vadd.s32 %v449, 1
        %v811 = vadd.s32 %v450, 1
        %vm812 = vcmp.ge.s32.totalorder %v796, 0
        %vm813 = vcmp.ge.s32.totalorder %v797, 0
        %vm814 = vcmp.ge.s32.totalorder %v798, 0
        %vm815 = vcmp.ge.s32.totalorder %v799, 0
        %vm816 = vcmp.ge.s32.totalorder %v800, 0
        %vm817 = vcmp.ge.s32.totalorder %v801, 0
        %vm818 = vcmp.ge.s32.totalorder %v802, 0
        %vm819 = vcmp.ge.s32.totalorder %v803, 0
        %vm820 = vcmp.ge.s32.totalorder %v804, 0
        %vm821 = vcmp.ge.s32.totalorder %v805, 0
        %vm822 = vcmp.ge.s32.totalorder %v806, 0
        %vm823 = vcmp.ge.s32.totalorder %v807, 0
        %vm824 = vcmp.ge.s32.totalorder %v808, 0
        %vm825 = vcmp.ge.s32.totalorder %v809, 0
        %vm826 = vcmp.ge.s32.totalorder %v810, 0
        %vm827 = vcmp.ge.s32.totalorder %v811, 0
        %vm828 = vcmp.lt.s32.totalorder %v796, 128
        %vm829 = vcmp.lt.s32.totalorder %v797, 128
        %vm830 = vcmp.lt.s32.totalorder %v798, 128
        %vm831 = vcmp.lt.s32.totalorder %v799, 128
        %vm832 = vcmp.lt.s32.totalorder %v800, 128
        %vm833 = vcmp.lt.s32.totalorder %v801, 128
        %vm834 = vcmp.lt.s32.totalorder %v802, 128
        %vm835 = vcmp.lt.s32.totalorder %v803, 128
        %vm836 = vcmp.lt.s32.totalorder %v804, 128
        %vm837 = vcmp.lt.s32.totalorder %v805, 128
        %vm838 = vcmp.lt.s32.totalorder %v806, 128
        %vm839 = vcmp.lt.s32.totalorder %v807, 128
        %vm840 = vcmp.lt.s32.totalorder %v808, 128
        %vm841 = vcmp.lt.s32.totalorder %v809, 128
        %vm842 = vcmp.lt.s32.totalorder %v810, 128
        %vm843 = vcmp.lt.s32.totalorder %v811, 128
        %vm844 = vmand %vm812, %vm828
        %vm845 = vmand %vm813, %vm829
        %vm846 = vmand %vm814, %vm830
        %vm847 = vmand %vm815, %vm831
        %vm848 = vmand %vm816, %vm832
        %vm849 = vmand %vm817, %vm833
        %vm850 = vmand %vm818, %vm834
        %vm851 = vmand %vm819, %vm835
        %vm852 = vmand %vm820, %vm836
        %vm853 = vmand %vm821, %vm837
        %vm854 = vmand %vm822, %vm838
        %vm855 = vmand %vm823, %vm839
        %vm856 = vmand %vm824, %vm840
        %vm857 = vmand %vm825, %vm841
        %vm858 = vmand %vm826, %vm842
        %vm859 = vmand %vm827, %vm843
        %v860 = vsel %vm844, %v794, 0.0
        %v861 = vsel %vm845, %v793, 0.0
        %v862 = vsel %vm846, %v792, 0.0
        %v863 = vsel %vm847, %v791, 0.0
        %v864 = vsel %vm848, %v790, 0.0
        %v865 = vsel %vm849, %v789, 0.0
        %v866 = vsel %vm850, %v788, 0.0
        %v867 = vsel %vm851, %v787, 0.0
        %v868 = vsel %vm852, %v786, 0.0
        %v869 = vsel %vm853, %v785, 0.0
        %v870 = vsel %vm854, %v784, 0.0
        %v871 = vsel %vm855, %v783, 0.0
        %v872 = vsel %vm856, %v782, 0.0
        %v873 = vsel %vm857, %v781, 0.0
        %v874 = vsel %vm858, %v780, 0.0
        %v875 = vsel %vm859, %v795, 0.0
        %s876 = sld [smem:[#allocation2 + $0x3]]
        %v877 = vstv %s876
        %v878 = vmul.f32 %v877, %v860
        %v879 = vmul.f32 %v877, %v861
        %v880 = vmul.f32 %v877, %v862
        %v881 = vmul.f32 %v877, %v863
        %v882 = vmul.f32 %v877, %v864
        %v883 = vmul.f32 %v877, %v865
        %v884 = vmul.f32 %v877, %v866
        %v885 = vmul.f32 %v877, %v867
        %v886 = vmul.f32 %v877, %v868
        %v887 = vmul.f32 %v877, %v869
        %v888 = vmul.f32 %v877, %v870
        %v889 = vmul.f32 %v877, %v871
        %v890 = vmul.f32 %v877, %v872
        %v891 = vmul.f32 %v877, %v873
        %v892 = vmul.f32 %v877, %v874
        %v893 = vmul.f32 %v877, %v875
        %v894 = vadd.f32 %v747, %v878
        %v895 = vadd.f32 %v748, %v879
        %v896 = vadd.f32 %v749, %v880
        %v897 = vadd.f32 %v750, %v881
        %v898 = vadd.f32 %v751, %v882
        %v899 = vadd.f32 %v752, %v883
        %v900 = vadd.f32 %v753, %v884
        %v901 = vadd.f32 %v754, %v885
        %v902 = vadd.f32 %v755, %v886
        %v903 = vadd.f32 %v756, %v887
        %v904 = vadd.f32 %v757, %v888
        %v905 = vadd.f32 %v758, %v889
        %v906 = vadd.f32 %v759, %v890
        %v907 = vadd.f32 %v760, %v891
        %v908 = vadd.f32 %v761, %v892
        %v909 = vadd.f32 %v762, %v893
        %v910 = vrot.slane %v226, 2
        %v911 = vrot.slane %v227, 2
        %v912 = vrot.slane %v228, 2
        %v913 = vrot.slane %v229, 2
        %v914 = vrot.slane %v230, 2
        %v915 = vrot.slane %v231, 2
        %v916 = vrot.slane %v232, 2
        %v917 = vrot.slane %v233, 2
        %v918 = vrot.slane %v234, 2
        %v919 = vrot.slane %v235, 2
        %v920 = vrot.slane %v236, 2
        %v921 = vrot.slane %v237, 2
        %v922 = vrot.slane %v238, 2
        %v923 = vrot.slane %v239, 2
        %v924 = vrot.slane %v240, 2
        %v925 = vrot.slane %v241, 2
        %vm926 = vcmp.lt.s32.totalorder %v243, 6
        %v927 = vsel %vm926, %v924, %v925
        %v928 = vsel %vm926, %v923, %v924
        %v929 = vsel %vm926, %v922, %v923
        %v930 = vsel %vm926, %v921, %v922
        %v931 = vsel %vm926, %v920, %v921
        %v932 = vsel %vm926, %v919, %v920
        %v933 = vsel %vm926, %v918, %v919
        %v934 = vsel %vm926, %v917, %v918
        %v935 = vsel %vm926, %v916, %v917
        %v936 = vsel %vm926, %v915, %v916
        %v937 = vsel %vm926, %v914, %v915
        %v938 = vsel %vm926, %v913, %v914
        %v939 = vsel %vm926, %v912, %v913
        %v940 = vsel %vm926, %v911, %v912
        %v941 = vsel %vm926, %v910, %v911
        %v942 = vsel %vm926, %v925, %v910
        %v943 = vadd.s32 %v435, 2
        %v944 = vadd.s32 %v436, 2
        %v945 = vadd.s32 %v437, 2
        %v946 = vadd.s32 %v438, 2
        %v947 = vadd.s32 %v439, 2
        %v948 = vadd.s32 %v440, 2
        %v949 = vadd.s32 %v441, 2
        %v950 = vadd.s32 %v442, 2
        %v951 = vadd.s32 %v443, 2
        %v952 = vadd.s32 %v444, 2
        %v953 = vadd.s32 %v445, 2
        %v954 = vadd.s32 %v446, 2
        %v955 = vadd.s32 %v447, 2
        %v956 = vadd.s32 %v448, 2
        %v957 = vadd.s32 %v449, 2
        %v958 = vadd.s32 %v450, 2
        %vm959 = vcmp.ge.s32.totalorder %v943, 0
        %vm960 = vcmp.ge.s32.totalorder %v944, 0
        %vm961 = vcmp.ge.s32.totalorder %v945, 0
        %vm962 = vcmp.ge.s32.totalorder %v946, 0
        %vm963 = vcmp.ge.s32.totalorder %v947, 0
        %vm964 = vcmp.ge.s32.totalorder %v948, 0
        %vm965 = vcmp.ge.s32.totalorder %v949, 0
        %vm966 = vcmp.ge.s32.totalorder %v950, 0
        %vm967 = vcmp.ge.s32.totalorder %v951, 0
        %vm968 = vcmp.ge.s32.totalorder %v952, 0
        %vm969 = vcmp.ge.s32.totalorder %v953, 0
        %vm970 = vcmp.ge.s32.totalorder %v954, 0
        %vm971 = vcmp.ge.s32.totalorder %v955, 0
        %vm972 = vcmp.ge.s32.totalorder %v956, 0
        %vm973 = vcmp.ge.s32.totalorder %v957, 0
        %vm974 = vcmp.ge.s32.totalorder %v958, 0
        %vm975 = vcmp.lt.s32.totalorder %v943, 128
        %vm976 = vcmp.lt.s32.totalorder %v944, 128
        %vm977 = vcmp.lt.s32.totalorder %v945, 128
        %vm978 = vcmp.lt.s32.totalorder %v946, 128
        %vm979 = vcmp.lt.s32.totalorder %v947, 128
        %vm980 = vcmp.lt.s32.totalorder %v948, 128
        %vm981 = vcmp.lt.s32.totalorder %v949, 128
        %vm982 = vcmp.lt.s32.totalorder %v950, 128
        %vm983 = vcmp.lt.s32.totalorder %v951, 128
        %vm984 = vcmp.lt.s32.totalorder %v952, 128
        %vm985 = vcmp.lt.s32.totalorder %v953, 128
        %vm986 = vcmp.lt.s32.totalorder %v954, 128
        %vm987 = vcmp.lt.s32.totalorder %v955, 128
        %vm988 = vcmp.lt.s32.totalorder %v956, 128
        %vm989 = vcmp.lt.s32.totalorder %v957, 128
        %vm990 = vcmp.lt.s32.totalorder %v958, 128
        %vm991 = vmand %vm959, %vm975
        %vm992 = vmand %vm960, %vm976
        %vm993 = vmand %vm961, %vm977
        %vm994 = vmand %vm962, %vm978
        %vm995 = vmand %vm963, %vm979
        %vm996 = vmand %vm964, %vm980
        %vm997 = vmand %vm965, %vm981
        %vm998 = vmand %vm966, %vm982
        %vm999 = vmand %vm967, %vm983
        %vm1000 = vmand %vm968, %vm984
        %vm1001 = vmand %vm969, %vm985
        %vm1002 = vmand %vm970, %vm986
        %vm1003 = vmand %vm971, %vm987
        %vm1004 = vmand %vm972, %vm988
        %vm1005 = vmand %vm973, %vm989
        %vm1006 = vmand %vm974, %vm990
        %v1007 = vsel %vm991, %v941, 0.0
        %v1008 = vsel %vm992, %v940, 0.0
        %v1009 = vsel %vm993, %v939, 0.0
        %v1010 = vsel %vm994, %v938, 0.0
        %v1011 = vsel %vm995, %v937, 0.0
        %v1012 = vsel %vm996, %v936, 0.0
        %v1013 = vsel %vm997, %v935, 0.0
        %v1014 = vsel %vm998, %v934, 0.0
        %v1015 = vsel %vm999, %v933, 0.0
        %v1016 = vsel %vm1000, %v932, 0.0
        %v1017 = vsel %vm1001, %v931, 0.0
        %v1018 = vsel %vm1002, %v930, 0.0
        %v1019 = vsel %vm1003, %v929, 0.0
        %v1020 = vsel %vm1004, %v928, 0.0
        %v1021 = vsel %vm1005, %v927, 0.0
        %v1022 = vsel %vm1006, %v942, 0.0
        %s1023 = sld [smem:[#allocation2 + $0x4]]
        %v1024 = vstv %s1023
        %v1025 = vmul.f32 %v1024, %v1007
        %v1026 = vmul.f32 %v1024, %v1008
        %v1027 = vmul.f32 %v1024, %v1009
        %v1028 = vmul.f32 %v1024, %v1010
        %v1029 = vmul.f32 %v1024, %v1011
        %v1030 = vmul.f32 %v1024, %v1012
        %v1031 = vmul.f32 %v1024, %v1013
        %v1032 = vmul.f32 %v1024, %v1014
        %v1033 = vmul.f32 %v1024, %v1015
        %v1034 = vmul.f32 %v1024, %v1016
        %v1035 = vmul.f32 %v1024, %v1017
        %v1036 = vmul.f32 %v1024, %v1018
        %v1037 = vmul.f32 %v1024, %v1019
        %v1038 = vmul.f32 %v1024, %v1020
        %v1039 = vmul.f32 %v1024, %v1021
        %v1040 = vmul.f32 %v1024, %v1022
        %v1041 = vadd.f32 %v894, %v1025
        %v1042 = vadd.f32 %v895, %v1026
        %v1043 = vadd.f32 %v896, %v1027
        %v1044 = vadd.f32 %v897, %v1028
        %v1045 = vadd.f32 %v898, %v1029
        %v1046 = vadd.f32 %v899, %v1030
        %v1047 = vadd.f32 %v900, %v1031
        %v1048 = vadd.f32 %v901, %v1032
        %v1049 = vadd.f32 %v902, %v1033
        %v1050 = vadd.f32 %v903, %v1034
        %v1051 = vadd.f32 %v904, %v1035
        %v1052 = vadd.f32 %v905, %v1036
        %v1053 = vadd.f32 %v906, %v1037
        %v1054 = vadd.f32 %v907, %v1038
        %v1055 = vadd.f32 %v908, %v1039
        %v1056 = vadd.f32 %v909, %v1040
        %v1057 = vxor.u32 %v1041, 2147483648
        %v1058 = vxor.u32 %v1042, 2147483648
        %v1059 = vxor.u32 %v1043, 2147483648
        %v1060 = vxor.u32 %v1044, 2147483648
        %v1061 = vxor.u32 %v1045, 2147483648
        %v1062 = vxor.u32 %v1046, 2147483648
        %v1063 = vxor.u32 %v1047, 2147483648
        %v1064 = vxor.u32 %v1048, 2147483648
        %v1065 = vxor.u32 %v1049, 2147483648
        %v1066 = vxor.u32 %v1050, 2147483648
        %v1067 = vxor.u32 %v1051, 2147483648
        %v1068 = vxor.u32 %v1052, 2147483648
        %v1069 = vxor.u32 %v1053, 2147483648
        %v1070 = vxor.u32 %v1054, 2147483648
        %v1071 = vxor.u32 %v1055, 2147483648
        %v1072 = vxor.u32 %v1056, 2147483648
        %v1073 = vmul.f32 %v1057, 1.442695
        %v1074 = vpow.pop %v1073
        %v1075 = vmul.f32 %v1058, 1.442695
        %v1076 = vpow.pop %v1075
        %v1077 = vmul.f32 %v1059, 1.442695
        %v1078 = vpow.pop %v1077
        %v1079 = vmul.f32 %v1060, 1.442695
        %v1080 = vpow.pop %v1079
        %v1081 = vmul.f32 %v1061, 1.442695
        %v1082 = vpow.pop %v1081
        %v1083 = vmul.f32 %v1062, 1.442695
        %v1084 = vpow.pop %v1083
        %v1085 = vmul.f32 %v1063, 1.442695
        %v1086 = vpow.pop %v1085
        %v1087 = vmul.f32 %v1064, 1.442695
        %v1088 = vpow.pop %v1087
        %v1089 = vmul.f32 %v1065, 1.442695
        %v1090 = vpow.pop %v1089
        %v1091 = vmul.f32 %v1066, 1.442695
        %v1092 = vpow.pop %v1091
        %v1093 = vmul.f32 %v1067, 1.442695
        %v1094 = vpow.pop %v1093
        %v1095 = vmul.f32 %v1068, 1.442695
        %v1096 = vpow.pop %v1095
        %v1097 = vmul.f32 %v1069, 1.442695
        %v1098 = vpow.pop %v1097
        %v1099 = vmul.f32 %v1070, 1.442695
        %v1100 = vpow.pop %v1099
        %v1101 = vmul.f32 %v1071, 1.442695
        %v1102 = vpow.pop %v1101
        %v1103 = vmul.f32 %v1072, 1.442695
        %v1104 = vpow.pop %v1103
        %v1105 = vadd.f32 %v1074, 1.0
        %v1106 = vadd.f32 %v1076, 1.0
        %v1107 = vadd.f32 %v1078, 1.0
        %v1108 = vadd.f32 %v1080, 1.0
        %v1109 = vadd.f32 %v1082, 1.0
        %v1110 = vadd.f32 %v1084, 1.0
        %v1111 = vadd.f32 %v1086, 1.0
        %v1112 = vadd.f32 %v1088, 1.0
        %v1113 = vadd.f32 %v1090, 1.0
        %v1114 = vadd.f32 %v1092, 1.0
        %v1115 = vadd.f32 %v1094, 1.0
        %v1116 = vadd.f32 %v1096, 1.0
        %v1117 = vadd.f32 %v1098, 1.0
        %v1118 = vadd.f32 %v1100, 1.0
        %v1119 = vadd.f32 %v1102, 1.0
        %v1120 = vadd.f32 %v1104, 1.0
        %v1121 = vrcp.pop %v1105
        %v1122 = vmul.f32 %v1105, %v1121
        %v1123 = vsub.f32 1.0, %v1122
        %v1124 = vmul.f32 %v1121, %v1123
        %v1125 = vadd.f32 %v1121, %v1124
        %vm1126 = vweird.f32 %v1105
        %vm1127 = vweird.f32 %v1121
        %vm1128 = vmor %vm1126, %vm1127
        %v1129 = vsel %vm1128, %v1121, %v1125
        %v1130 = vand.u32 2147483647, %v1105
        %vm1131 = vcmp.eq.f32.partialorder %v1130, 8.507059e+37
        %v1132 = vand.u32 %v1105, 2147483648
        %v1133 = vor.u32 1.1754944e-38, %v1132
        %v1134 = vsel %vm1131, %v1133, %v1129
        %v1135 = vmul.f32 1.0, %v1134
        %v1136 = vrcp.pop %v1106
        %v1137 = vmul.f32 %v1106, %v1136
        %v1138 = vsub.f32 1.0, %v1137
        %v1139 = vmul.f32 %v1136, %v1138
        %v1140 = vadd.f32 %v1136, %v1139
        %vm1141 = vweird.f32 %v1106
        %vm1142 = vweird.f32 %v1136
        %vm1143 = vmor %vm1141, %vm1142
        %v1144 = vsel %vm1143, %v1136, %v1140
        %v1145 = vand.u32 2147483647, %v1106
        %vm1146 = vcmp.eq.f32.partialorder %v1145, 8.507059e+37
        %v1147 = vand.u32 %v1106, 2147483648
        %v1148 = vor.u32 1.1754944e-38, %v1147
        %v1149 = vsel %vm1146, %v1148, %v1144
        %v1150 = vmul.f32 1.0, %v1149
        %v1151 = vrcp.pop %v1107
        %v1152 = vmul.f32 %v1107, %v1151
        %v1153 = vsub.f32 1.0, %v1152
        %v1154 = vmul.f32 %v1151, %v1153
        %v1155 = vadd.f32 %v1151, %v1154
        %vm1156 = vweird.f32 %v1107
        %vm1157 = vweird.f32 %v1151
        %vm1158 = vmor %vm1156, %vm1157
        %v1159 = vsel %vm1158, %v1151, %v1155
        %v1160 = vand.u32 2147483647, %v1107
        %vm1161 = vcmp.eq.f32.partialorder %v1160, 8.507059e+37
        %v1162 = vand.u32 %v1107, 2147483648
        %v1163 = vor.u32 1.1754944e-38, %v1162
        %v1164 = vsel %vm1161, %v1163, %v1159
        %v1165 = vmul.f32 1.0, %v1164
        %v1166 = vrcp.pop %v1108
        %v1167 = vmul.f32 %v1108, %v1166
        %v1168 = vsub.f32 1.0, %v1167
        %v1169 = vmul.f32 %v1166, %v1168
        %v1170 = vadd.f32 %v1166, %v1169
        %vm1171 = vweird.f32 %v1108
        %vm1172 = vweird.f32 %v1166
        %vm1173 = vmor %vm1171, %vm1172
        %v1174 = vsel %vm1173, %v1166, %v1170
        %v1175 = vand.u32 2147483647, %v1108
        %vm1176 = vcmp.eq.f32.partialorder %v1175, 8.507059e+37
        %v1177 = vand.u32 %v1108, 2147483648
        %v1178 = vor.u32 1.1754944e-38, %v1177
        %v1179 = vsel %vm1176, %v1178, %v1174
        %v1180 = vmul.f32 1.0, %v1179
        %v1181 = vrcp.pop %v1109
        %v1182 = vmul.f32 %v1109, %v1181
        %v1183 = vsub.f32 1.0, %v1182
        %v1184 = vmul.f32 %v1181, %v1183
        %v1185 = vadd.f32 %v1181, %v1184
        %vm1186 = vweird.f32 %v1109
        %vm1187 = vweird.f32 %v1181
        %vm1188 = vmor %vm1186, %vm1187
        %v1189 = vsel %vm1188, %v1181, %v1185
        %v1190 = vand.u32 2147483647, %v1109
        %vm1191 = vcmp.eq.f32.partialorder %v1190, 8.507059e+37
        %v1192 = vand.u32 %v1109, 2147483648
        %v1193 = vor.u32 1.1754944e-38, %v1192
        %v1194 = vsel %vm1191, %v1193, %v1189
        %v1195 = vmul.f32 1.0, %v1194
        %v1196 = vrcp.pop %v1110
        %v1197 = vmul.f32 %v1110, %v1196
        %v1198 = vsub.f32 1.0, %v1197
        %v1199 = vmul.f32 %v1196, %v1198
        %v1200 = vadd.f32 %v1196, %v1199
        %vm1201 = vweird.f32 %v1110
        %vm1202 = vweird.f32 %v1196
        %vm1203 = vmor %vm1201, %vm1202
        %v1204 = vsel %vm1203, %v1196, %v1200
        %v1205 = vand.u32 2147483647, %v1110
        %vm1206 = vcmp.eq.f32.partialorder %v1205, 8.507059e+37
        %v1207 = vand.u32 %v1110, 2147483648
        %v1208 = vor.u32 1.1754944e-38, %v1207
        %v1209 = vsel %vm1206, %v1208, %v1204
        %v1210 = vmul.f32 1.0, %v1209
        %v1211 = vrcp.pop %v1111
        %v1212 = vmul.f32 %v1111, %v1211
        %v1213 = vsub.f32 1.0, %v1212
        %v1214 = vmul.f32 %v1211, %v1213
        %v1215 = vadd.f32 %v1211, %v1214
        %vm1216 = vweird.f32 %v1111
        %vm1217 = vweird.f32 %v1211
        %vm1218 = vmor %vm1216, %vm1217
        %v1219 = vsel %vm1218, %v1211, %v1215
        %v1220 = vand.u32 2147483647, %v1111
        %vm1221 = vcmp.eq.f32.partialorder %v1220, 8.507059e+37
        %v1222 = vand.u32 %v1111, 2147483648
        %v1223 = vor.u32 1.1754944e-38, %v1222
        %v1224 = vsel %vm1221, %v1223, %v1219
        %v1225 = vmul.f32 1.0, %v1224
        %v1226 = vrcp.pop %v1112
        %v1227 = vmul.f32 %v1112, %v1226
        %v1228 = vsub.f32 1.0, %v1227
        %v1229 = vmul.f32 %v1226, %v1228
        %v1230 = vadd.f32 %v1226, %v1229
        %vm1231 = vweird.f32 %v1112
        %vm1232 = vweird.f32 %v1226
        %vm1233 = vmor %vm1231, %vm1232
        %v1234 = vsel %vm1233, %v1226, %v1230
        %v1235 = vand.u32 2147483647, %v1112
        %vm1236 = vcmp.eq.f32.partialorder %v1235, 8.507059e+37
        %v1237 = vand.u32 %v1112, 2147483648
        %v1238 = vor.u32 1.1754944e-38, %v1237
        %v1239 = vsel %vm1236, %v1238, %v1234
        %v1240 = vmul.f32 1.0, %v1239
        %v1241 = vrcp.pop %v1113
        %v1242 = vmul.f32 %v1113, %v1241
        %v1243 = vsub.f32 1.0, %v1242
        %v1244 = vmul.f32 %v1241, %v1243
        %v1245 = vadd.f32 %v1241, %v1244
        %vm1246 = vweird.f32 %v1113
        %vm1247 = vweird.f32 %v1241
        %vm1248 = vmor %vm1246, %vm1247
        %v1249 = vsel %vm1248, %v1241, %v1245
        %v1250 = vand.u32 2147483647, %v1113
        %vm1251 = vcmp.eq.f32.partialorder %v1250, 8.507059e+37
        %v1252 = vand.u32 %v1113, 2147483648
        %v1253 = vor.u32 1.1754944e-38, %v1252
        %v1254 = vsel %vm1251, %v1253, %v1249
        %v1255 = vmul.f32 1.0, %v1254
        %v1256 = vrcp.pop %v1114
        %v1257 = vmul.f32 %v1114, %v1256
        %v1258 = vsub.f32 1.0, %v1257
        %v1259 = vmul.f32 %v1256, %v1258
        %v1260 = vadd.f32 %v1256, %v1259
        %vm1261 = vweird.f32 %v1114
        %vm1262 = vweird.f32 %v1256
        %vm1263 = vmor %vm1261, %vm1262
        %v1264 = vsel %vm1263, %v1256, %v1260
        %v1265 = vand.u32 2147483647, %v1114
        %vm1266 = vcmp.eq.f32.partialorder %v1265, 8.507059e+37
        %v1267 = vand.u32 %v1114, 2147483648
        %v1268 = vor.u32 1.1754944e-38, %v1267
        %v1269 = vsel %vm1266, %v1268, %v1264
        %v1270 = vmul.f32 1.0, %v1269
        %v1271 = vrcp.pop %v1115
        %v1272 = vmul.f32 %v1115, %v1271
        %v1273 = vsub.f32 1.0, %v1272
        %v1274 = vmul.f32 %v1271, %v1273
        %v1275 = vadd.f32 %v1271, %v1274
        %vm1276 = vweird.f32 %v1115
        %vm1277 = vweird.f32 %v1271
        %vm1278 = vmor %vm1276, %vm1277
        %v1279 = vsel %vm1278, %v1271, %v1275
        %v1280 = vand.u32 2147483647, %v1115
        %vm1281 = vcmp.eq.f32.partialorder %v1280, 8.507059e+37
        %v1282 = vand.u32 %v1115, 2147483648
        %v1283 = vor.u32 1.1754944e-38, %v1282
        %v1284 = vsel %vm1281, %v1283, %v1279
        %v1285 = vmul.f32 1.0, %v1284
        %v1286 = vrcp.pop %v1116
        %v1287 = vmul.f32 %v1116, %v1286
        %v1288 = vsub.f32 1.0, %v1287
        %v1289 = vmul.f32 %v1286, %v1288
        %v1290 = vadd.f32 %v1286, %v1289
        %vm1291 = vweird.f32 %v1116
        %vm1292 = vweird.f32 %v1286
        %vm1293 = vmor %vm1291, %vm1292
        %v1294 = vsel %vm1293, %v1286, %v1290
        %v1295 = vand.u32 2147483647, %v1116
        %vm1296 = vcmp.eq.f32.partialorder %v1295, 8.507059e+37
        %v1297 = vand.u32 %v1116, 2147483648
        %v1298 = vor.u32 1.1754944e-38, %v1297
        %v1299 = vsel %vm1296, %v1298, %v1294
        %v1300 = vmul.f32 1.0, %v1299
        %v1301 = vrcp.pop %v1117
        %v1302 = vmul.f32 %v1117, %v1301
        %v1303 = vsub.f32 1.0, %v1302
        %v1304 = vmul.f32 %v1301, %v1303
        %v1305 = vadd.f32 %v1301, %v1304
        %vm1306 = vweird.f32 %v1117
        %vm1307 = vweird.f32 %v1301
        %vm1308 = vmor %vm1306, %vm1307
        %v1309 = vsel %vm1308, %v1301, %v1305
        %v1310 = vand.u32 2147483647, %v1117
        %vm1311 = vcmp.eq.f32.partialorder %v1310, 8.507059e+37
        %v1312 = vand.u32 %v1117, 2147483648
        %v1313 = vor.u32 1.1754944e-38, %v1312
        %v1314 = vsel %vm1311, %v1313, %v1309
        %v1315 = vmul.f32 1.0, %v1314
        %v1316 = vrcp.pop %v1118
        %v1317 = vmul.f32 %v1118, %v1316
        %v1318 = vsub.f32 1.0, %v1317
        %v1319 = vmul.f32 %v1316, %v1318
        %v1320 = vadd.f32 %v1316, %v1319
        %vm1321 = vweird.f32 %v1118
        %vm1322 = vweird.f32 %v1316
        %vm1323 = vmor %vm1321, %vm1322
        %v1324 = vsel %vm1323, %v1316, %v1320
        %v1325 = vand.u32 2147483647, %v1118
        %vm1326 = vcmp.eq.f32.partialorder %v1325, 8.507059e+37
        %v1327 = vand.u32 %v1118, 2147483648
        %v1328 = vor.u32 1.1754944e-38, %v1327
        %v1329 = vsel %vm1326, %v1328, %v1324
        %v1330 = vmul.f32 1.0, %v1329
        %v1331 = vrcp.pop %v1119
        %v1332 = vmul.f32 %v1119, %v1331
        %v1333 = vsub.f32 1.0, %v1332
        %v1334 = vmul.f32 %v1331, %v1333
        %v1335 = vadd.f32 %v1331, %v1334
        %vm1336 = vweird.f32 %v1119
        %vm1337 = vweird.f32 %v1331
        %vm1338 = vmor %vm1336, %vm1337
        %v1339 = vsel %vm1338, %v1331, %v1335
        %v1340 = vand.u32 2147483647, %v1119
        %vm1341 = vcmp.eq.f32.partialorder %v1340, 8.507059e+37
        %v1342 = vand.u32 %v1119, 2147483648
        %v1343 = vor.u32 1.1754944e-38, %v1342
        %v1344 = vsel %vm1341, %v1343, %v1339
        %v1345 = vmul.f32 1.0, %v1344
        %v1346 = vrcp.pop %v1120
        %v1347 = vmul.f32 %v1120, %v1346
        %v1348 = vsub.f32 1.0, %v1347
        %v1349 = vmul.f32 %v1346, %v1348
        %v1350 = vadd.f32 %v1346, %v1349
        %vm1351 = vweird.f32 %v1120
        %vm1352 = vweird.f32 %v1346
        %vm1353 = vmor %vm1351, %vm1352
        %v1354 = vsel %vm1353, %v1346, %v1350
        %v1355 = vand.u32 2147483647, %v1120
        %vm1356 = vcmp.eq.f32.partialorder %v1355, 8.507059e+37
        %v1357 = vand.u32 %v1120, 2147483648
        %v1358 = vor.u32 1.1754944e-38, %v1357
        %v1359 = vsel %vm1356, %v1358, %v1354
        %v1360 = vmul.f32 1.0, %v1359
        %1362 = vset.pattern.permute.xlu0 0
        %1363 = vperm.xlu0 %1362, %v1135
        %v1364 = vpop.permute.xlu0 %1363
        %1367 = vset.pattern.permute.xlu0 0
        %1368 = vperm.xlu0 %1367, %v1150
        %v1369 = vpop.permute.xlu0 %1368
        %1372 = vset.pattern.permute.xlu0 0
        %1373 = vperm.xlu0 %1372, %v1165
        %v1374 = vpop.permute.xlu0 %1373
        %1377 = vset.pattern.permute.xlu0 0
        %1378 = vperm.xlu0 %1377, %v1180
        %v1379 = vpop.permute.xlu0 %1378
        %1382 = vset.pattern.permute.xlu0 0
        %1383 = vperm.xlu0 %1382, %v1195
        %v1384 = vpop.permute.xlu0 %1383
        %1387 = vset.pattern.permute.xlu0 0
        %1388 = vperm.xlu0 %1387, %v1210
        %v1389 = vpop.permute.xlu0 %1388
        %1392 = vset.pattern.permute.xlu0 0
        %1393 = vperm.xlu0 %1392, %v1225
        %v1394 = vpop.permute.xlu0 %1393
        %1397 = vset.pattern.permute.xlu0 0
        %1398 = vperm.xlu0 %1397, %v1240
        %v1399 = vpop.permute.xlu0 %1398
        %1402 = vset.pattern.permute.xlu0 0
        %1403 = vperm.xlu0 %1402, %v1255
        %v1404 = vpop.permute.xlu0 %1403
        %1407 = vset.pattern.permute.xlu0 0
        %1408 = vperm.xlu0 %1407, %v1270
        %v1409 = vpop.permute.xlu0 %1408
        %1412 = vset.pattern.permute.xlu0 0
        %1413 = vperm.xlu0 %1412, %v1285
        %v1414 = vpop.permute.xlu0 %1413
        %1417 = vset.pattern.permute.xlu0 0
        %1418 = vperm.xlu0 %1417, %v1300
        %v1419 = vpop.permute.xlu0 %1418
        %1422 = vset.pattern.permute.xlu0 0
        %1423 = vperm.xlu0 %1422, %v1315
        %v1424 = vpop.permute.xlu0 %1423
        %1427 = vset.pattern.permute.xlu0 0
        %1428 = vperm.xlu0 %1427, %v1330
        %v1429 = vpop.permute.xlu0 %1428
        %1432 = vset.pattern.permute.xlu0 0
        %1433 = vperm.xlu0 %1432, %v1345
        %v1434 = vpop.permute.xlu0 %1433
        %1437 = vset.pattern.permute.xlu0 0
        %1438 = vperm.xlu0 %1437, %v1360
        %v1439 = vpop.permute.xlu0 %1438
        %v1441 = vmul.f32 %v161, %v1364
        %v1442 = vmul.f32 %v162, %v1369
        %v1443 = vmul.f32 %v163, %v1374
        %v1444 = vmul.f32 %v164, %v1379
        %v1445 = vmul.f32 %v165, %v1384
        %v1446 = vmul.f32 %v166, %v1389
        %v1447 = vmul.f32 %v167, %v1394
        %v1448 = vmul.f32 %v168, %v1399
        %v1449 = vmul.f32 %v169, %v1404
        %v1450 = vmul.f32 %v170, %v1409
        %v1451 = vmul.f32 %v171, %v1414
        %v1452 = vmul.f32 %v172, %v1419
        %v1453 = vmul.f32 %v173, %v1424
        %v1454 = vmul.f32 %v174, %v1429
        %v1455 = vmul.f32 %v175, %v1434
        %v1456 = vmul.f32 %v176, %v1439
        %1457 = vst.msk [vmem:[%s159] sm:$0xff] %vm177, %v1441
        %1458 = vst.msk [vmem:[%s159 + $0x8] sm:$0xff] %vm177, %v1442
        %1459 = vst.msk [vmem:[%s159 + $0x10] sm:$0xff] %vm177, %v1443
        %1460 = vst.msk [vmem:[%s159 + $0x18] sm:$0xff] %vm177, %v1444
        %1461 = vst.msk [vmem:[%s159 + $0x20] sm:$0xff] %vm177, %v1445
        %1462 = vst.msk [vmem:[%s159 + $0x28] sm:$0xff] %vm177, %v1446
        %1463 = vst.msk [vmem:[%s159 + $0x30] sm:$0xff] %vm177, %v1447
        %1464 = vst.msk [vmem:[%s159 + $0x38] sm:$0xff] %vm177, %v1448
        %1465 = vst.msk [vmem:[%s159 + $0x40] sm:$0xff] %vm177, %v1449
        %1466 = vst.msk [vmem:[%s159 + $0x48] sm:$0xff] %vm177, %v1450
        %1467 = vst.msk [vmem:[%s159 + $0x50] sm:$0xff] %vm177, %v1451
        %1468 = vst.msk [vmem:[%s159 + $0x58] sm:$0xff] %vm177, %v1452
        %1469 = vst.msk [vmem:[%s159 + $0x60] sm:$0xff] %vm177, %v1453
        %1470 = vst.msk [vmem:[%s159 + $0x68] sm:$0xff] %vm177, %v1454
        %1471 = vst.msk [vmem:[%s159 + $0x70] sm:$0xff] %vm177, %v1455
        %1472 = vst.msk [vmem:[%s159 + $0x78] sm:$0xff] %vm177, %v1456
        %s1473 = smul.u32 16, %s14
        %p1474 = scmp.lt.s32.totalorder %s1473, 31
        %s1475 = scalar_select %p1474, %s1473, 31
        %s1476 = smul.addr %s1475, 8
        %s1477 = scalar_lea.vmem %s2, %s1476
        // Predicated region
        $region33: #{tpu_custom_call.1} parent=27 // pred_check
          %p1478 = pneg %p79
        $region34: #{tpu_custom_call.1} parent=27 // pred_check_branch
          %1480 = sbr.rel (%p1478) target = $region36
        $region35: #{tpu_custom_call.1} parent=27 // pred_region
          %s1481 = smul.u32 16, %s14
        $region36: #{tpu_custom_call.1} parent=27 // pred_fallthru
          _
      $region28: #{tpu_custom_call.1} parent=5 // pred_fallthru
        _
      %p1482 = scmp.le.s32.totalorder 2, %s9
      // Predicated region
      $region37: #{tpu_custom_call.1} parent=5 // pred_check
        %p1483 = pneg %p1482
      $region38: #{tpu_custom_call.1} parent=5 // pred_check_branch
        %1485 = sbr.rel (%p1483) target = $region40
      $region39: #{tpu_custom_call.1} parent=5 // pred_region
        %s1486 = ssub.s32 %s9, 2
        // Predicated region
        $region41: #{tpu_custom_call.1} parent=39 // pred_check
          %p1487 = pneg %p85
        $region42: #{tpu_custom_call.1} parent=39 // pred_check_branch
          %1489 = sbr.rel (%p1487) target = $region44
        $region43: #{tpu_custom_call.1} parent=39 // pred_region
          %s1490 = smul.u32 16, %s15
          %p1491 = scmp.lt.s32.totalorder %s1490, 31
          %s1492 = scalar_select %p1491, %s1490, 31
          %s1493 = smul.addr %s1492, 8
          %s1494 = scalar_lea.vmem %s2, %s1493
        $region44: #{tpu_custom_call.1} parent=39 // pred_fallthru
          _
      $region40: #{tpu_custom_call.1} parent=5 // pred_fallthru
        _
    $region6: #{tpu_custom_call.1} parent=1 // loop_footer
      %s13 = sadd.s32 1, %s9
    $region7: #{tpu_custom_call.1} parent=1 // loop_footer_branch
      %8 = sbr.rel target = $region3
    $region8: #{tpu_custom_call.1} parent=1 // loop_exit
      _
    %1495 = vsyncpa [#allocation3], 1
    %s1496 = scalar_lea.sflag [#allocation3], 1
    %1497 = vsyncpa %s1496, 1

</llo_original>
